<compile_context>
chip_gen: v5e
topology: v5e:2x2
jax: 0.10.0
libtpu: 0.0.40
codegen_flags: <defaults>
</compile_context>

<pallas_src>
import functools

import jax
import jax.numpy as jnp
from jax.experimental import pallas as pl
from jax.experimental.pallas import tpu as pltpu

_H1 = 512          # per-head first hidden width (fused first layer = 2 * _H1)
_H2 = 256          # boundary-head second hidden width
_NOUT = 8          # real head output width
_NPAD = 128        # lane-padded merged output width
_TAIL_K = _H2 + _H1   # 768: merged tail-matmul contraction dim


def _round_up(n, m):
    return ((n + m - 1) // m) * m


def _cdiv(a, b):
    return -(-a // b)


def _extractor_kernel(x_ref,
                      w1_ref, b1_ref,       # fused first layer (F_pad, 1024)
                      w2_ref, b2_ref,       # boundary Linear(512, 256)
                      wt_ref, bt_ref,       # merged tail (768, 128)
                      out_ref,              # (TB, 128) f32: lanes 0-7 bounds, 8-15 quality
                      *, msg_len):
    # ---- fused first layer for both heads: (TB, 1024), bf16 MXU, f32 accum ----
    x = x_ref[...]                                                    # (TB, F_pad) bf16
    h1 = jnp.dot(x, w1_ref[...], preferred_element_type=jnp.float32) + b1_ref[...]
    h1 = jnp.maximum(h1, 0.0)                                         # f32 (v5e-safe)
    h_b = h1[:, :_H1].astype(jnp.bfloat16)                            # lane-aligned split
    h_q = h1[:, _H1:].astype(jnp.bfloat16)

    # ---- boundary second layer: Linear(512, 256) -> ReLU ----
    h2 = jnp.dot(h_b, w2_ref[...], preferred_element_type=jnp.float32) + b2_ref[...]
    h2 = jnp.maximum(h2, 0.0).astype(jnp.bfloat16)

    # ---- merged tail matmul: [h2 | h_q] (TB, 768) @ (768, 128) ----
    # lanes 0-7 <- boundary logits (rows 0-255), lanes 8-15 <- quality logits.
    tail = jnp.concatenate([h2, h_q], axis=1)                         # (TB, 768) bf16
    logits = jnp.dot(tail, wt_ref[...], preferred_element_type=jnp.float32) + bt_ref[...]

    # sigmoid everywhere; boundary lanes additionally scaled by msg_len.
    # (int32 truncation of the boundary lanes happens in the wrapper.)
    lane = jax.lax.broadcasted_iota(jnp.int32, (1, _NPAD), 1)
    scale = jnp.where(lane < _NOUT, jnp.float32(msg_len), jnp.float32(1.0))
    out_ref[...] = jax.nn.sigmoid(logits) * scale


def prepare_params(params):
    """One-time parameter prep: fuse first layers, build merged tail weight,
    zero-pad F to a lane multiple, cast MXU inputs to bf16."""
    f = params["bw1"].shape[0]
    f_pad = _round_up(f, 128)

    w1 = jnp.concatenate([params["bw1"], params["qw1"]], axis=1)      # (F, 1024)
    if f_pad != f:
        w1 = jnp.pad(w1, ((0, f_pad - f), (0, 0)))
    w1 = w1.astype(jnp.bfloat16)
    b1 = jnp.concatenate([params["bb1"], params["qb1"]], axis=1).astype(jnp.float32)

    w2 = params["bw2"].astype(jnp.bfloat16)                           # (512, 256)
    b2 = params["bb2"].astype(jnp.float32)

    wt = jnp.zeros((_TAIL_K, _NPAD), jnp.float32)
    wt = wt.at[:_H2, :_NOUT].set(params["bw3"])                       # boundary -> lanes 0-7
    wt = wt.at[_H2:, _NOUT:2 * _NOUT].set(params["qw2"])              # quality  -> lanes 8-15
    wt = wt.astype(jnp.bfloat16)
    bt = jnp.zeros((1, _NPAD), jnp.float32)
    bt = bt.at[:, :_NOUT].set(params["bb3"])
    bt = bt.at[:, _NOUT:2 * _NOUT].set(params["qb2"])

    return dict(w1=w1, b1=b1, w2=w2, b2=b2, wt=wt, bt=bt)


def redundant_segment_extractor(x, message, prepared, *, tb=512):
    """x: (B, F) f32, message: (B, Lmsg) — only message.shape[1] is used.
    `prepared` comes from prepare_params()."""
    B, F = x.shape
    msg_len = float(message.shape[1])              # static at trace time
    w1 = prepared["w1"]
    F_pad = w1.shape[0]

    # ---- batch tiling: >=2 grid steps when B >= 16 (v7x dual-TC), TB chosen
    #      to minimize last-tile padding, rows padded to sublane multiple ----
    n_steps = max(2, _cdiv(B, tb)) if B >= 16 else 1
    TB = _round_up(_cdiv(B, n_steps), 8)
    B_pad = TB * n_steps

    x_in = x.astype(jnp.bfloat16)
    if B_pad != B or F_pad != F:
        x_in = jnp.pad(x_in, ((0, B_pad - B), (0, F_pad - F)))

    resident = lambda i: (0, 0)   # weights/biases: same block every step -> VMEM-resident

    b1, w2, b2, wt, bt = (prepared["b1"], prepared["w2"], prepared["b2"],
                          prepared["wt"], prepared["bt"])

    flops = 2 * B_pad * (F_pad * 2 * _H1 + _H1 * _H2 + _TAIL_K * _NPAD)
    bytes_accessed = (int(x_in.size) * 2
                      + sum(int(a.size) * a.dtype.itemsize
                            for a in (w1, b1, w2, b2, wt, bt))
                      + B_pad * _NPAD * 4)

    weight_bytes = sum(int(a.size) * a.dtype.itemsize
                       for a in (w1, b1, w2, b2, wt, bt))
    vmem_est = (2 * TB * F_pad * 2                 # x tile, double-buffered bf16
                + 2 * weight_bytes                 # resident params (double-buffer bound)
                + 2 * TB * _NPAD * 4               # output tile, double-buffered f32
                + TB * 2 * _H1 * 4                 # h1 f32
                + TB * _TAIL_K * 2                 # tail bf16
                + TB * _H2 * 4)                    # h2 f32
    vmem_limit = int(min(64 * 2**20, max(32 * 2**20, 2 * vmem_est)))

    out = pl.pallas_call(
        functools.partial(_extractor_kernel, msg_len=msg_len),
        out_shape=jax.ShapeDtypeStruct((B_pad, _NPAD), jnp.float32),
        grid=(n_steps,),
        in_specs=[
            pl.BlockSpec((TB, F_pad), lambda i: (i, 0)),
            pl.BlockSpec(w1.shape, resident),
            pl.BlockSpec(b1.shape, resident),
            pl.BlockSpec(w2.shape, resident),
            pl.BlockSpec(b2.shape, resident),
            pl.BlockSpec(wt.shape, resident),
            pl.BlockSpec(bt.shape, resident),
        ],
        out_specs=pl.BlockSpec((TB, _NPAD), lambda i: (i, 0)),
        compiler_params=pltpu.CompilerParams(
            dimension_semantics=("parallel",),
            vmem_limit_bytes=vmem_limit),
        cost_estimate=pl.CostEstimate(flops=flops,
                                      transcendentals=B_pad * _NPAD,
                                      bytes_accessed=bytes_accessed),
    )(x_in, w1, b1, w2, b2, wt, bt)

    # Slice away batch padding + lane padding; int cast on the tiny (B, 8) slice.
    boundaries = out[:B, :_NOUT].astype(jnp.int32)         # floor(sigmoid * L), values >= 0
    quality = out[:B, _NOUT:2 * _NOUT]
    return boundaries, quality


def init_params(key, in_features):
    """Deterministic synthetic parameters (shapes match the torch module)."""
    ks = jax.random.split(key, 10)

    def lin(kw, kb, fan_in, fan_out):
        scale = 1.0 / jnp.sqrt(jnp.float32(fan_in))
        w = jax.random.uniform(kw, (fan_in, fan_out), jnp.float32, -scale, scale)
        b = jax.random.uniform(kb, (1, fan_out), jnp.float32, -scale, scale)
        return w, b

    bw1, bb1 = lin(ks[0], ks[1], in_features, _H1)
    bw2, bb2 = lin(ks[2], ks[3], _H1, _H2)
    bw3, bb3 = lin(ks[4], ks[5], _H2, _NOUT)
    qw1, qb1 = lin(ks[6], ks[7], in_features, _H1)
    qw2, qb2 = lin(ks[8], ks[9], _H1, _NOUT)
    return dict(bw1=bw1, bb1=bb1, bw2=bw2, bb2=bb2, bw3=bw3, bb3=bb3,
                qw1=qw1, qb1=qb1, qw2=qw2, qb2=qb2)


def _reference(x, message, params):
    """Pure-JAX f32 reference of the torch forward (eval mode)."""
    L = message.shape[1]
    h = jnp.maximum(x @ params["bw1"] + params["bb1"], 0.0)
    h = jnp.maximum(h @ params["bw2"] + params["bb2"], 0.0)
    logits = h @ params["bw3"] + params["bb3"]
    bounds = (jax.nn.sigmoid(logits) * L).astype(jnp.int32)
    q = jnp.maximum(x @ params["qw1"] + params["qb1"], 0.0)
    qual = jax.nn.sigmoid(q @ params["qw2"] + params["qb2"])
    return bounds, qual


if __name__ == "__main__":
    key = jax.random.PRNGKey(0)
    k_x, k_msg, k_p = jax.random.split(key, 3)

    batch, in_features, msg_len = 4, 32, 16
    x = jax.random.normal(k_x, (batch, in_features), dtype=jnp.float32)
    message = jax.random.normal(k_msg, (batch, msg_len), dtype=jnp.float32)
    params = init_params(k_p, in_features)

    prepared = prepare_params(params)   # one-time weight prep (hoisted out of call path)

    boundaries, quality = redundant_segment_extractor(x, message, prepared)
    jax.block_until_ready((boundaries, quality))

    assert boundaries.shape == (batch, _NOUT) and boundaries.dtype == jnp.int32
    assert quality.shape == (batch, _NOUT) and quality.dtype == jnp.float32
    assert bool(jnp.all((boundaries >= 0) & (boundaries <= msg_len)))
    assert bool(jnp.all((quality >= 0.0) & (quality <= 1.0)))

    # Loose check vs f32 reference (kernel uses bf16 on the MXU).
    ref_b, ref_q = _reference(x, message, params)
    assert bool(jnp.max(jnp.abs(quality - ref_q)) < 0.1)
    assert bool(jnp.max(jnp.abs(boundaries - ref_b)) <= 1)

    print("KERNEL_OK")
</pallas_src>

<mosaic_0001>
module attributes {stable_mosaic.version = 11 : i64} {
  func.func @_extractor_kernel(%arg0: i32, %arg1: memref<8x128xbf16, #tpu.memory_space<vmem>>, %arg2: memref<128x1024xbf16, #tpu.memory_space<vmem>>, %arg3: memref<1x1024xf32, #tpu.memory_space<vmem>>, %arg4: memref<512x256xbf16, #tpu.memory_space<vmem>>, %arg5: memref<1x256xf32, #tpu.memory_space<vmem>>, %arg6: memref<768x128xbf16, #tpu.memory_space<vmem>>, %arg7: memref<1x128xf32, #tpu.memory_space<vmem>>, %arg8: memref<8x128xf32, #tpu.memory_space<vmem>>) attributes {dimension_semantics = [#tpu.dimension_semantics<parallel>], iteration_bounds = array<i64: 1>, scalar_prefetch = 0 : i64, scratch_operands = 0 : i64, tpu.core_type = #tpu.core_type<tc>, window_params = [{transform_indices = @transform_0, window_bounds = array<i64: 8, 128>}, {pipeline_mode = #tpu.pipeline_mode<synchronous>, transform_indices = @transform_1, window_bounds = array<i64: 128, 1024>}, {pipeline_mode = #tpu.pipeline_mode<synchronous>, transform_indices = @transform_2, window_bounds = array<i64: 1, 1024>}, {pipeline_mode = #tpu.pipeline_mode<synchronous>, transform_indices = @transform_3, window_bounds = array<i64: 512, 256>}, {pipeline_mode = #tpu.pipeline_mode<synchronous>, transform_indices = @transform_4, window_bounds = array<i64: 1, 256>}, {pipeline_mode = #tpu.pipeline_mode<synchronous>, transform_indices = @transform_5, window_bounds = array<i64: 768, 128>}, {pipeline_mode = #tpu.pipeline_mode<synchronous>, transform_indices = @transform_6, window_bounds = array<i64: 1, 128>}, {transform_indices = @transform_7, window_bounds = array<i64: 8, 128>}]} {
    %c0 = arith.constant 0 : index
    %c0_0 = arith.constant 0 : index
    %0 = vector.load %arg1[%c0, %c0_0] : memref<8x128xbf16, #tpu.memory_space<vmem>>, vector<8x128xbf16>
    %c0_1 = arith.constant 0 : index
    %c0_2 = arith.constant 0 : index
    %1 = vector.load %arg2[%c0_1, %c0_2] : memref<128x1024xbf16, #tpu.memory_space<vmem>>, vector<128x1024xbf16>
    %cst = arith.constant dense<0.000000e+00> : vector<8x1024xf32>
    %2 = tpu.matmul %0, %1, %cst {dimension_numbers = #tpu.dot_dimension_numbers<[1], [0], [0], [1], [0, 0, 1, 1], [], []>} : vector<8x128xbf16>, vector<128x1024xbf16>, vector<8x1024xf32> -> vector<8x1024xf32>
    %c0_3 = arith.constant 0 : index
    %c0_4 = arith.constant 0 : index
    %3 = vector.load %arg3[%c0_3, %c0_4] : memref<1x1024xf32, #tpu.memory_space<vmem>>, vector<1x1024xf32>
    %4 = vector.broadcast %3 : vector<1x1024xf32> to vector<8x1024xf32>
    %5 = arith.addf %2, %4 : vector<8x1024xf32>
    %cst_5 = arith.constant 0.000000e+00 : f32
    %6 = vector.broadcast %cst_5 : f32 to vector<8x1024xf32>
    %7 = arith.maximumf %5, %6 : vector<8x1024xf32>
    %8 = vector.extract_strided_slice %7 {offsets = [0, 0], sizes = [8, 512], strides = [1, 1]} : vector<8x1024xf32> to vector<8x512xf32>
    %9 = arith.truncf %8 : vector<8x512xf32> to vector<8x512xbf16>
    %10 = vector.extract_strided_slice %7 {offsets = [0, 512], sizes = [8, 512], strides = [1, 1]} : vector<8x1024xf32> to vector<8x512xf32>
    %11 = arith.truncf %10 : vector<8x512xf32> to vector<8x512xbf16>
    %c0_6 = arith.constant 0 : index
    %c0_7 = arith.constant 0 : index
    %12 = vector.load %arg4[%c0_6, %c0_7] : memref<512x256xbf16, #tpu.memory_space<vmem>>, vector<512x256xbf16>
    %cst_8 = arith.constant dense<0.000000e+00> : vector<8x256xf32>
    %13 = tpu.matmul %9, %12, %cst_8 {dimension_numbers = #tpu.dot_dimension_numbers<[1], [0], [0], [1], [0, 0, 1, 1], [], []>} : vector<8x512xbf16>, vector<512x256xbf16>, vector<8x256xf32> -> vector<8x256xf32>
    %c0_9 = arith.constant 0 : index
    %c0_10 = arith.constant 0 : index
    %14 = vector.load %arg5[%c0_9, %c0_10] : memref<1x256xf32, #tpu.memory_space<vmem>>, vector<1x256xf32>
    %15 = vector.broadcast %14 : vector<1x256xf32> to vector<8x256xf32>
    %16 = arith.addf %13, %15 : vector<8x256xf32>
    %cst_11 = arith.constant 0.000000e+00 : f32
    %17 = vector.broadcast %cst_11 : f32 to vector<8x256xf32>
    %18 = arith.maximumf %16, %17 : vector<8x256xf32>
    %19 = arith.truncf %18 : vector<8x256xf32> to vector<8x256xbf16>
    %20 = tpu.concatenate %19, %11 in 1 : vector<8x256xbf16>, vector<8x512xbf16> -> vector<8x768xbf16>
    %c0_12 = arith.constant 0 : index
    %c0_13 = arith.constant 0 : index
    %21 = vector.load %arg6[%c0_12, %c0_13] : memref<768x128xbf16, #tpu.memory_space<vmem>>, vector<768x128xbf16>
    %cst_14 = arith.constant dense<0.000000e+00> : vector<8x128xf32>
    %22 = tpu.matmul %20, %21, %cst_14 {dimension_numbers = #tpu.dot_dimension_numbers<[1], [0], [0], [1], [0, 0, 1, 1], [], []>} : vector<8x768xbf16>, vector<768x128xbf16>, vector<8x128xf32> -> vector<8x128xf32>
    %c0_15 = arith.constant 0 : index
    %c0_16 = arith.constant 0 : index
    %23 = vector.load %arg7[%c0_15, %c0_16] : memref<1x128xf32, #tpu.memory_space<vmem>>, vector<1x128xf32>
    %24 = vector.broadcast %23 : vector<1x128xf32> to vector<8x128xf32>
    %25 = arith.addf %22, %24 : vector<8x128xf32>
    %26 = tpu.iota {dimensions = array<i32: 1>} : vector<1x128xi32>
    %c8_i32 = arith.constant 8 : i32
    %27 = vector.broadcast %c8_i32 : i32 to vector<1x128xi32>
    %28 = arith.cmpi slt, %26, %27 : vector<1x128xi32>
    %cst_17 = arith.constant 1.600000e+01 : f32
    %cst_18 = arith.constant 1.000000e+00 : f32
    %29 = vector.broadcast %cst_17 : f32 to vector<1x128xf32>
    %30 = vector.broadcast %cst_18 : f32 to vector<1x128xf32>
    %31 = arith.select %28, %29, %30 : vector<1x128xi1>, vector<1x128xf32>
    %32 = arith.negf %25 : vector<8x128xf32>
    %33 = math.exp %32 : vector<8x128xf32>
    %cst_19 = arith.constant 1.000000e+00 : f32
    %34 = vector.broadcast %cst_19 : f32 to vector<8x128xf32>
    %35 = arith.addf %34, %33 : vector<8x128xf32>
    %36 = arith.divf %34, %35 : vector<8x128xf32>
    %37 = vector.broadcast %31 : vector<1x128xf32> to vector<8x128xf32>
    %38 = arith.mulf %36, %37 : vector<8x128xf32>
    %c0_20 = arith.constant 0 : index
    %c0_21 = arith.constant 0 : index
    %39 = vector.load %arg8[%c0_20, %c0_21] : memref<8x128xf32, #tpu.memory_space<vmem>>, vector<8x128xf32>
    tpu.vector_store %arg8[%c0_20, %c0_21], %38 {strides = array<i32>} : memref<8x128xf32, #tpu.memory_space<vmem>>, vector<8x128xf32>,
    return
  }
  func.func @transform_0(%arg0: i32) -> (i32, i32) {
    %c0_i32 = arith.constant 0 : i32
    %c0_i32_0 = arith.constant 0 : i32
    return %arg0, %c0_i32 : i32, i32
  }
  func.func @transform_1(%arg0: i32) -> (i32, i32) {
    %c0_i32 = arith.constant 0 : i32
    %c0_i32_0 = arith.constant 0 : i32
    %c0_i32_1 = arith.constant 0 : i32
    return %c0_i32, %c0_i32_0 : i32, i32
  }
  func.func @transform_2(%arg0: i32) -> (i32, i32) {
    %c0_i32 = arith.constant 0 : i32
    %c0_i32_0 = arith.constant 0 : i32
    %c0_i32_1 = arith.constant 0 : i32
    return %c0_i32, %c0_i32_0 : i32, i32
  }
  func.func @transform_3(%arg0: i32) -> (i32, i32) {
    %c0_i32 = arith.constant 0 : i32
    %c0_i32_0 = arith.constant 0 : i32
    %c0_i32_1 = arith.constant 0 : i32
    return %c0_i32, %c0_i32_0 : i32, i32
  }
  func.func @transform_4(%arg0: i32) -> (i32, i32) {
    %c0_i32 = arith.constant 0 : i32
    %c0_i32_0 = arith.constant 0 : i32
    %c0_i32_1 = arith.constant 0 : i32
    return %c0_i32, %c0_i32_0 : i32, i32
  }
  func.func @transform_5(%arg0: i32) -> (i32, i32) {
    %c0_i32 = arith.constant 0 : i32
    %c0_i32_0 = arith.constant 0 : i32
    %c0_i32_1 = arith.constant 0 : i32
    return %c0_i32, %c0_i32_0 : i32, i32
  }
  func.func @transform_6(%arg0: i32) -> (i32, i32) {
    %c0_i32 = arith.constant 0 : i32
    %c0_i32_0 = arith.constant 0 : i32
    %c0_i32_1 = arith.constant 0 : i32
    return %c0_i32, %c0_i32_0 : i32, i32
  }
  func.func @transform_7(%arg0: i32) -> (i32, i32) {
    %c0_i32 = arith.constant 0 : i32
    %c0_i32_0 = arith.constant 0 : i32
    return %arg0, %c0_i32 : i32, i32
  }
}

</mosaic_0001>

<llo_original>
// kernel: tpu_custom_call.1
$region0: #{tpu_custom_call.1}
  #allocation0 [shape = 'u32[]', space=smem, size = 0x4, offset = 0x4, fixed_abs, tag = 'smem constant byte address 0x4 - core index']
  #allocation1 [shape = 'u32[72,128]{1,0:T(1,128)}', space=vmem, size = 0x9000, scoped, tag = 'internal scratch']
  %s0 = inlined_call_operand.hbm [shape: bf16[8,128], index: 0, kind: input, shape index: {}]
  %s1 = inlined_call_operand.hbm [shape: bf16[128,1024], index: 1, kind: input, shape index: {}]
  %s2 = inlined_call_operand.hbm [shape: f32[1,1024], index: 2, kind: input, shape index: {}]
  %s3 = inlined_call_operand.hbm [shape: bf16[512,256], index: 3, kind: input, shape index: {}]
  %s4 = inlined_call_operand.vmem [shape: f32[1,256], index: 4, kind: input, shape index: {}]
  %s5 = inlined_call_operand.hbm [shape: bf16[768,128], index: 5, kind: input, shape index: {}]
  %s6 = inlined_call_operand.vmem [shape: f32[1,128], index: 6, kind: input, shape index: {}]
  %s7 = inlined_call_operand.hbm [shape: f32[8,128], index: 7, kind: output, shape index: {}]
  %s8 = sld [smem:[#allocation0]]
  $region58: #{tpu_custom_call.1} parent=0
    _
  %s10 = ssub.s32 1, %s8
  %s11 = scalar_select 0, %s10, %s8
  $region1: #{tpu_custom_call.1} parent=0
    #allocation2 [shape = 'u8[2048]{0}', space=vmem, size = 0x800, scoped, tag = 'input window, operand 0, single buffered']
    #allocation3 [shape = 's32[1]{0}', space=sflag, size = 0x4, scoped, tag = 'scoped memory for tpu_custom_call.1']
    #allocation4 [shape = 's32[1]{0}', space=sflag, size = 0x4, scoped, tag = 'scoped memory for tpu_custom_call.1']
    #allocation5 [shape = 'u8[262144]{0}', space=vmem, size = 0x40000, scoped, tag = 'input window, operand 1, single buffered']
    #allocation6 [shape = 's32[1]{0}', space=sflag, size = 0x4, scoped, tag = 'scoped memory for tpu_custom_call.1']
    #allocation7 [shape = 'u8[4096]{0}', space=vmem, size = 0x1000, scoped, tag = 'input window, operand 2, single buffered']
    #allocation8 [shape = 'u8[262144]{0}', space=vmem, size = 0x40000, scoped, tag = 'input window, operand 3, single buffered']
    #allocation9 [shape = 's32[1]{0}', space=sflag, size = 0x4, scoped, tag = 'scoped memory for tpu_custom_call.1']
    #allocation10 [shape = 'u8[196608]{0}', space=vmem, size = 0x30000, scoped, tag = 'input window, operand 5, single buffered']
    #allocation11 [shape = 'u8[4096]{0}', space=vmem, size = 0x1000, scoped, tag = 'output window, operand 0, single buffered']
    %12 = vsyncpa [#allocation3], 0
    %13 = vsyncpa [#allocation6], 0
    %14 = vsyncpa [#allocation9], 0
    %15 = vsyncpa [#allocation4], 0
    // Predicated region
    $region2: #{tpu_custom_call.1} parent=1 // pred_check
      _
    $region3: #{tpu_custom_call.1} parent=1 // pred_check_branch
      %17 = sbr.rel (0) target = $region5
    $region4: #{tpu_custom_call.1} parent=1 // pred_region
      %19 = vsyncadd [#allocation3], 0
      %s21 = sshll.u32 %s0, 4
      %s22 = int_to_ptr.hbm [resolvable:$true] %s21
      %s23 = sshll.u32 [#allocation2], 4
      %s24 = int_to_ptr.vmem [resolvable:$true] %s23
      %26 = dma.hbm_to_vmem [thread:$0]  %s22, 64, %s24, [#allocation3]
    $region5: #{tpu_custom_call.1} parent=1 // pred_fallthru
      _
    // Predicated region
    $region6: #{tpu_custom_call.1} parent=1 // pred_check
      _
    $region7: #{tpu_custom_call.1} parent=1 // pred_check_branch
      %28 = sbr.rel (0) target = $region9
    $region8: #{tpu_custom_call.1} parent=1 // pred_region
      %30 = vsyncadd [#allocation6], 0
      %s31 = sshll.u32 %s1, 4
      %s32 = int_to_ptr.hbm [resolvable:$true] %s31
      %s33 = sshll.u32 [#allocation5], 4
      %s34 = int_to_ptr.vmem [resolvable:$true] %s33
      %39 = dma.hbm_to_vmem [thread:$0]  %s32, 8192, %s34, [#allocation6], 512, 512, 32
    $region9: #{tpu_custom_call.1} parent=1 // pred_fallthru
      _
    // Predicated region
    $region10: #{tpu_custom_call.1} parent=1 // pred_check
      _
    $region11: #{tpu_custom_call.1} parent=1 // pred_check_branch
      %41 = sbr.rel (0) target = $region13
    $region12: #{tpu_custom_call.1} parent=1 // pred_region
      %43 = vsyncadd [#allocation6], 0
      %s45 = sshll.u32 %s2, 4
      %s46 = int_to_ptr.hbm [resolvable:$true] %s45
      %s47 = sshll.u32 [#allocation7], 4
      %s48 = int_to_ptr.vmem [resolvable:$true] %s47
      %50 = dma.hbm_to_vmem [thread:$0]  %s46, 128, %s48, [#allocation6]
    $region13: #{tpu_custom_call.1} parent=1 // pred_fallthru
      _
    // Predicated region
    $region14: #{tpu_custom_call.1} parent=1 // pred_check
      _
    $region15: #{tpu_custom_call.1} parent=1 // pred_check_branch
      %52 = sbr.rel (0) target = $region17
    $region16: #{tpu_custom_call.1} parent=1 // pred_region
      %54 = vsyncadd [#allocation9], 0
      %s55 = sshll.u32 %s3, 4
      %s56 = int_to_ptr.hbm [resolvable:$true] %s55
      %s57 = sshll.u32 [#allocation8], 4
      %s58 = int_to_ptr.vmem [resolvable:$true] %s57
      %63 = dma.hbm_to_vmem [thread:$0]  %s56, 8192, %s58, [#allocation9], 128, 128, 8
    $region17: #{tpu_custom_call.1} parent=1 // pred_fallthru
      _
    // Predicated region
    $region18: #{tpu_custom_call.1} parent=1 // pred_check
      _
    $region19: #{tpu_custom_call.1} parent=1 // pred_check_branch
      %65 = sbr.rel (0) target = $region21
    $region20: #{tpu_custom_call.1} parent=1 // pred_region
      _
    $region21: #{tpu_custom_call.1} parent=1 // pred_fallthru
      _
    // Predicated region
    $region22: #{tpu_custom_call.1} parent=1 // pred_check
      _
    $region23: #{tpu_custom_call.1} parent=1 // pred_check_branch
      %67 = sbr.rel (0) target = $region25
    $region24: #{tpu_custom_call.1} parent=1 // pred_region
      %69 = vsyncadd [#allocation9], 0
      %s70 = sshll.u32 %s5, 4
      %s71 = int_to_ptr.hbm [resolvable:$true] %s70
      %s72 = sshll.u32 [#allocation10], 4
      %s73 = int_to_ptr.vmem [resolvable:$true] %s72
      %78 = dma.hbm_to_vmem [thread:$0]  %s71, 6144, %s73, [#allocation9], 64, 64, 4
    $region25: #{tpu_custom_call.1} parent=1 // pred_fallthru
      _
    // Predicated region
    $region26: #{tpu_custom_call.1} parent=1 // pred_check
      _
    $region27: #{tpu_custom_call.1} parent=1 // pred_check_branch
      %80 = sbr.rel (0) target = $region29
    $region28: #{tpu_custom_call.1} parent=1 // pred_region
      _
    $region29: #{tpu_custom_call.1} parent=1 // pred_fallthru
      _
    // Predicated region
    $region30: #{tpu_custom_call.1} parent=1 // pred_check
      _
    $region31: #{tpu_custom_call.1} parent=1 // pred_check_branch
      %82 = sbr.rel (0) target = $region33
    $region32: #{tpu_custom_call.1} parent=1 // pred_region
      %84 = dma.done [#allocation3], 64
    $region33: #{tpu_custom_call.1} parent=1 // pred_fallthru
      _
    // Predicated region
    $region34: #{tpu_custom_call.1} parent=1 // pred_check
      _
    $region35: #{tpu_custom_call.1} parent=1 // pred_check_branch
      %86 = sbr.rel (0) target = $region37
    $region36: #{tpu_custom_call.1} parent=1 // pred_region
      %88 = dma.done [#allocation6], 8192
    $region37: #{tpu_custom_call.1} parent=1 // pred_fallthru
      _
    // Predicated region
    $region38: #{tpu_custom_call.1} parent=1 // pred_check
      _
    $region39: #{tpu_custom_call.1} parent=1 // pred_check_branch
      %90 = sbr.rel (0) target = $region41
    $region40: #{tpu_custom_call.1} parent=1 // pred_region
      %92 = dma.done [#allocation6], 128
    $region41: #{tpu_custom_call.1} parent=1 // pred_fallthru
      _
    // Predicated region
    $region42: #{tpu_custom_call.1} parent=1 // pred_check
      _
    $region43: #{tpu_custom_call.1} parent=1 // pred_check_branch
      %94 = sbr.rel (0) target = $region45
    $region44: #{tpu_custom_call.1} parent=1 // pred_region
      %96 = dma.done [#allocation9], 8192
    $region45: #{tpu_custom_call.1} parent=1 // pred_fallthru
      _
    // Predicated region
    $region46: #{tpu_custom_call.1} parent=1 // pred_check
      _
    $region47: #{tpu_custom_call.1} parent=1 // pred_check_branch
      %98 = sbr.rel (0) target = $region49
    $region48: #{tpu_custom_call.1} parent=1 // pred_region
      %100 = dma.done [#allocation9], 6144
    $region49: #{tpu_custom_call.1} parent=1 // pred_fallthru
      _
    %v101 = vld [vmem:[#allocation2] sm:$0xf]
    %v102 = vld [vmem:[#allocation5] sm:$0xff]
    %v103 = vld [vmem:[#allocation5 + $0x8] sm:$0xff]
    %v104 = vld [vmem:[#allocation5 + $0x10] sm:$0xff]
    %v105 = vld [vmem:[#allocation5 + $0x18] sm:$0xff]
    %v106 = vld [vmem:[#allocation5 + $0x20] sm:$0xff]
    %v107 = vld [vmem:[#allocation5 + $0x28] sm:$0xff]
    %v108 = vld [vmem:[#allocation5 + $0x30] sm:$0xff]
    %v109 = vld [vmem:[#allocation5 + $0x38] sm:$0xff]
    %v110 = vld [vmem:[#allocation5 + $0x40] sm:$0xff]
    %v111 = vld [vmem:[#allocation5 + $0x48] sm:$0xff]
    %v112 = vld [vmem:[#allocation5 + $0x50] sm:$0xff]
    %v113 = vld [vmem:[#allocation5 + $0x58] sm:$0xff]
    %v114 = vld [vmem:[#allocation5 + $0x60] sm:$0xff]
    %v115 = vld [vmem:[#allocation5 + $0x68] sm:$0xff]
    %v116 = vld [vmem:[#allocation5 + $0x70] sm:$0xff]
    %v117 = vld [vmem:[#allocation5 + $0x78] sm:$0xff]
    %v118 = vld [vmem:[#allocation5 + $0x80] sm:$0xff]
    %v119 = vld [vmem:[#allocation5 + $0x88] sm:$0xff]
    %v120 = vld [vmem:[#allocation5 + $0x90] sm:$0xff]
    %v121 = vld [vmem:[#allocation5 + $0x98] sm:$0xff]
    %v122 = vld [vmem:[#allocation5 + $0xa0] sm:$0xff]
    %v123 = vld [vmem:[#allocation5 + $0xa8] sm:$0xff]
    %v124 = vld [vmem:[#allocation5 + $0xb0] sm:$0xff]
    %v125 = vld [vmem:[#allocation5 + $0xb8] sm:$0xff]
    %v126 = vld [vmem:[#allocation5 + $0xc0] sm:$0xff]
    %v127 = vld [vmem:[#allocation5 + $0xc8] sm:$0xff]
    %v128 = vld [vmem:[#allocation5 + $0xd0] sm:$0xff]
    %v129 = vld [vmem:[#allocation5 + $0xd8] sm:$0xff]
    %v130 = vld [vmem:[#allocation5 + $0xe0] sm:$0xff]
    %v131 = vld [vmem:[#allocation5 + $0xe8] sm:$0xff]
    %v132 = vld [vmem:[#allocation5 + $0xf0] sm:$0xff]
    %v133 = vld [vmem:[#allocation5 + $0xf8] sm:$0xff]
    %v134 = vld [vmem:[#allocation5 + $0x100] sm:$0xff]
    %v135 = vld [vmem:[#allocation5 + $0x108] sm:$0xff]
    %v136 = vld [vmem:[#allocation5 + $0x110] sm:$0xff]
    %v137 = vld [vmem:[#allocation5 + $0x118] sm:$0xff]
    %v138 = vld [vmem:[#allocation5 + $0x120] sm:$0xff]
    %v139 = vld [vmem:[#allocation5 + $0x128] sm:$0xff]
    %v140 = vld [vmem:[#allocation5 + $0x130] sm:$0xff]
    %v141 = vld [vmem:[#allocation5 + $0x138] sm:$0xff]
    %v142 = vld [vmem:[#allocation5 + $0x140] sm:$0xff]
    %v143 = vld [vmem:[#allocation5 + $0x148] sm:$0xff]
    %v144 = vld [vmem:[#allocation5 + $0x150] sm:$0xff]
    %v145 = vld [vmem:[#allocation5 + $0x158] sm:$0xff]
    %v146 = vld [vmem:[#allocation5 + $0x160] sm:$0xff]
    %v147 = vld [vmem:[#allocation5 + $0x168] sm:$0xff]
    %v148 = vld [vmem:[#allocation5 + $0x170] sm:$0xff]
    %v149 = vld [vmem:[#allocation5 + $0x178] sm:$0xff]
    %v150 = vld [vmem:[#allocation5 + $0x180] sm:$0xff]
    %v151 = vld [vmem:[#allocation5 + $0x188] sm:$0xff]
    %v152 = vld [vmem:[#allocation5 + $0x190] sm:$0xff]
    %v153 = vld [vmem:[#allocation5 + $0x198] sm:$0xff]
    %v154 = vld [vmem:[#allocation5 + $0x1a0] sm:$0xff]
    %v155 = vld [vmem:[#allocation5 + $0x1a8] sm:$0xff]
    %v156 = vld [vmem:[#allocation5 + $0x1b0] sm:$0xff]
    %v157 = vld [vmem:[#allocation5 + $0x1b8] sm:$0xff]
    %v158 = vld [vmem:[#allocation5 + $0x1c0] sm:$0xff]
    %v159 = vld [vmem:[#allocation5 + $0x1c8] sm:$0xff]
    %v160 = vld [vmem:[#allocation5 + $0x1d0] sm:$0xff]
    %v161 = vld [vmem:[#allocation5 + $0x1d8] sm:$0xff]
    %v162 = vld [vmem:[#allocation5 + $0x1e0] sm:$0xff]
    %v163 = vld [vmem:[#allocation5 + $0x1e8] sm:$0xff]
    %v164 = vld [vmem:[#allocation5 + $0x1f0] sm:$0xff]
    %v165 = vld [vmem:[#allocation5 + $0x1f8] sm:$0xff]
    %v166 = vld [vmem:[#allocation7] sm:$0xff]
    %v168 = vperm.slane %v166, 0
    %v169 = vperm.slane %v166, 1
    %v170 = vperm.slane %v166, 2
    %v171 = vperm.slane %v166, 3
    %v172 = vperm.slane %v166, 4
    %v173 = vperm.slane %v166, 5
    %v174 = vperm.slane %v166, 6
    %v175 = vperm.slane %v166, 7
    %v248 = vunpack.c.l.b16 %v102
    %v249 = vunpack.c.h.b16 %v102
    %v250 = vunpack.c.l.b16 %v103
    %v251 = vunpack.c.h.b16 %v103
    %v252 = vunpack.c.l.b16 %v104
    %v253 = vunpack.c.h.b16 %v104
    %v254 = vunpack.c.l.b16 %v105
    %v255 = vunpack.c.h.b16 %v105
    %v256 = vunpack.c.l.b16 %v106
    %v257 = vunpack.c.h.b16 %v106
    %v258 = vunpack.c.l.b16 %v107
    %v259 = vunpack.c.h.b16 %v107
    %v260 = vunpack.c.l.b16 %v108
    %v261 = vunpack.c.h.b16 %v108
    %v262 = vunpack.c.l.b16 %v109
    %v263 = vunpack.c.h.b16 %v109
    %v264 = vunpack.c.l.b16 %v110
    %v265 = vunpack.c.h.b16 %v110
    %v266 = vunpack.c.l.b16 %v111
    %v267 = vunpack.c.h.b16 %v111
    %v268 = vunpack.c.l.b16 %v112
    %v269 = vunpack.c.h.b16 %v112
    %v270 = vunpack.c.l.b16 %v113
    %v271 = vunpack.c.h.b16 %v113
    %v272 = vunpack.c.l.b16 %v114
    %v273 = vunpack.c.h.b16 %v114
    %v274 = vunpack.c.l.b16 %v115
    %v275 = vunpack.c.h.b16 %v115
    %v276 = vunpack.c.l.b16 %v116
    %v277 = vunpack.c.h.b16 %v116
    %v278 = vunpack.c.l.b16 %v117
    %v279 = vunpack.c.h.b16 %v117
    %v280 = vunpack.c.l.b16 %v118
    %v281 = vunpack.c.h.b16 %v118
    %v282 = vunpack.c.l.b16 %v119
    %v283 = vunpack.c.h.b16 %v119
    %v284 = vunpack.c.l.b16 %v120
    %v285 = vunpack.c.h.b16 %v120
    %v286 = vunpack.c.l.b16 %v121
    %v287 = vunpack.c.h.b16 %v121
    %v288 = vunpack.c.l.b16 %v122
    %v289 = vunpack.c.h.b16 %v122
    %v290 = vunpack.c.l.b16 %v123
    %v291 = vunpack.c.h.b16 %v123
    %v292 = vunpack.c.l.b16 %v124
    %v293 = vunpack.c.h.b16 %v124
    %v294 = vunpack.c.l.b16 %v125
    %v295 = vunpack.c.h.b16 %v125
    %v296 = vunpack.c.l.b16 %v126
    %v297 = vunpack.c.h.b16 %v126
    %v298 = vunpack.c.l.b16 %v127
    %v299 = vunpack.c.h.b16 %v127
    %v300 = vunpack.c.l.b16 %v128
    %v301 = vunpack.c.h.b16 %v128
    %v302 = vunpack.c.l.b16 %v129
    %v303 = vunpack.c.h.b16 %v129
    %v304 = vunpack.c.l.b16 %v130
    %v305 = vunpack.c.h.b16 %v130
    %v306 = vunpack.c.l.b16 %v131
    %v307 = vunpack.c.h.b16 %v131
    %v308 = vunpack.c.l.b16 %v132
    %v309 = vunpack.c.h.b16 %v132
    %v310 = vunpack.c.l.b16 %v133
    %v311 = vunpack.c.h.b16 %v133
    %v312 = vunpack.c.l.b16 %v134
    %v313 = vunpack.c.h.b16 %v134
    %v314 = vunpack.c.l.b16 %v135
    %v315 = vunpack.c.h.b16 %v135
    %v316 = vunpack.c.l.b16 %v136
    %v317 = vunpack.c.h.b16 %v136
    %v318 = vunpack.c.l.b16 %v137
    %v319 = vunpack.c.h.b16 %v137
    %v320 = vunpack.c.l.b16 %v138
    %v321 = vunpack.c.h.b16 %v138
    %v322 = vunpack.c.l.b16 %v139
    %v323 = vunpack.c.h.b16 %v139
    %v324 = vunpack.c.l.b16 %v140
    %v325 = vunpack.c.h.b16 %v140
    %v326 = vunpack.c.l.b16 %v141
    %v327 = vunpack.c.h.b16 %v141
    %v328 = vunpack.c.l.b16 %v142
    %v329 = vunpack.c.h.b16 %v142
    %v330 = vunpack.c.l.b16 %v143
    %v331 = vunpack.c.h.b16 %v143
    %v332 = vunpack.c.l.b16 %v144
    %v333 = vunpack.c.h.b16 %v144
    %v334 = vunpack.c.l.b16 %v145
    %v335 = vunpack.c.h.b16 %v145
    %v336 = vunpack.c.l.b16 %v146
    %v337 = vunpack.c.h.b16 %v146
    %v338 = vunpack.c.l.b16 %v147
    %v339 = vunpack.c.h.b16 %v147
    %v340 = vunpack.c.l.b16 %v148
    %v341 = vunpack.c.h.b16 %v148
    %v342 = vunpack.c.l.b16 %v149
    %v343 = vunpack.c.h.b16 %v149
    %v344 = vunpack.c.l.b16 %v150
    %v345 = vunpack.c.h.b16 %v150
    %v346 = vunpack.c.l.b16 %v151
    %v347 = vunpack.c.h.b16 %v151
    %v348 = vunpack.c.l.b16 %v152
    %v349 = vunpack.c.h.b16 %v152
    %v350 = vunpack.c.l.b16 %v153
    %v351 = vunpack.c.h.b16 %v153
    %v352 = vunpack.c.l.b16 %v154
    %v353 = vunpack.c.h.b16 %v154
    %v354 = vunpack.c.l.b16 %v155
    %v355 = vunpack.c.h.b16 %v155
    %v356 = vunpack.c.l.b16 %v156
    %v357 = vunpack.c.h.b16 %v156
    %v358 = vunpack.c.l.b16 %v157
    %v359 = vunpack.c.h.b16 %v157
    %v360 = vunpack.c.l.b16 %v158
    %v361 = vunpack.c.h.b16 %v158
    %v362 = vunpack.c.l.b16 %v159
    %v363 = vunpack.c.h.b16 %v159
    %v364 = vunpack.c.l.b16 %v160
    %v365 = vunpack.c.h.b16 %v160
    %v366 = vunpack.c.l.b16 %v161
    %v367 = vunpack.c.h.b16 %v161
    %v368 = vunpack.c.l.b16 %v162
    %v369 = vunpack.c.h.b16 %v162
    %v370 = vunpack.c.l.b16 %v163
    %v371 = vunpack.c.h.b16 %v163
    %v372 = vunpack.c.l.b16 %v164
    %v373 = vunpack.c.h.b16 %v164
    %v374 = vunpack.c.l.b16 %v165
    %v375 = vunpack.c.h.b16 %v165
    %v376 = vpack.c.b16 %v256, %v248
    %v377 = vpack.c.b16 %v257, %v249
    %v378 = vpack.c.b16 %v258, %v250
    %v379 = vpack.c.b16 %v259, %v251
    %v380 = vpack.c.b16 %v260, %v252
    %v381 = vpack.c.b16 %v261, %v253
    %v382 = vpack.c.b16 %v262, %v254
    %v383 = vpack.c.b16 %v263, %v255
    %v384 = vpack.c.b16 %v272, %v264
    %v385 = vpack.c.b16 %v273, %v265
    %v386 = vpack.c.b16 %v274, %v266
    %v387 = vpack.c.b16 %v275, %v267
    %v388 = vpack.c.b16 %v276, %v268
    %v389 = vpack.c.b16 %v277, %v269
    %v390 = vpack.c.b16 %v278, %v270
    %v391 = vpack.c.b16 %v279, %v271
    %v392 = vpack.c.b16 %v288, %v280
    %v393 = vpack.c.b16 %v289, %v281
    %v394 = vpack.c.b16 %v290, %v282
    %v395 = vpack.c.b16 %v291, %v283
    %v396 = vpack.c.b16 %v292, %v284
    %v397 = vpack.c.b16 %v293, %v285
    %v398 = vpack.c.b16 %v294, %v286
    %v399 = vpack.c.b16 %v295, %v287
    %v400 = vpack.c.b16 %v304, %v296
    %v401 = vpack.c.b16 %v305, %v297
    %v402 = vpack.c.b16 %v306, %v298
    %v403 = vpack.c.b16 %v307, %v299
    %v404 = vpack.c.b16 %v308, %v300
    %v405 = vpack.c.b16 %v309, %v301
    %v406 = vpack.c.b16 %v310, %v302
    %v407 = vpack.c.b16 %v311, %v303
    %v408 = vpack.c.b16 %v320, %v312
    %v409 = vpack.c.b16 %v321, %v313
    %v410 = vpack.c.b16 %v322, %v314
    %v411 = vpack.c.b16 %v323, %v315
    %v412 = vpack.c.b16 %v324, %v316
    %v413 = vpack.c.b16 %v325, %v317
    %v414 = vpack.c.b16 %v326, %v318
    %v415 = vpack.c.b16 %v327, %v319
    %v416 = vpack.c.b16 %v336, %v328
    %v417 = vpack.c.b16 %v337, %v329
    %v418 = vpack.c.b16 %v338, %v330
    %v419 = vpack.c.b16 %v339, %v331
    %v420 = vpack.c.b16 %v340, %v332
    %v421 = vpack.c.b16 %v341, %v333
    %v422 = vpack.c.b16 %v342, %v334
    %v423 = vpack.c.b16 %v343, %v335
    %v424 = vpack.c.b16 %v352, %v344
    %v425 = vpack.c.b16 %v353, %v345
    %v426 = vpack.c.b16 %v354, %v346
    %v427 = vpack.c.b16 %v355, %v347
    %v428 = vpack.c.b16 %v356, %v348
    %v429 = vpack.c.b16 %v357, %v349
    %v430 = vpack.c.b16 %v358, %v350
    %v431 = vpack.c.b16 %v359, %v351
    %v432 = vpack.c.b16 %v368, %v360
    %v433 = vpack.c.b16 %v369, %v361
    %v434 = vpack.c.b16 %v370, %v362
    %v435 = vpack.c.b16 %v371, %v363
    %v436 = vpack.c.b16 %v372, %v364
    %v437 = vpack.c.b16 %v373, %v365
    %v438 = vpack.c.b16 %v374, %v366
    %v439 = vpack.c.b16 %v375, %v367
    %504 = vmatpush.bf16.msra.mxu0 %v432
    %505 = vmatpush.bf16.msra.mxu0 %v424
    %506 = vmatpush.bf16.msra.mxu0 %v416
    %507 = vmatpush.bf16.msra.mxu0 %v408
    %508 = vmatpush.bf16.msra.mxu0 %v400
    %509 = vmatpush.bf16.msra.mxu0 %v392
    %510 = vmatpush.bf16.msra.mxu0 %v384
    %511 = vmatpush.bf16.msra.mxu0 %v376
    %512 = vmatmul.bf16.gmra.mxu0 %v101
    %v513 = vpop.f32.mrf.mxu0
    %v514 = vadd.f32 %v168, %v513
    %v515 = vpop.f32.mrf.mxu0
    %516 = vdwg.mxu0
    %517 = vmatpush.bf16.msra.mxu0 %v433
    %518 = vmatpush.bf16.msra.mxu0 %v425
    %519 = vmatpush.bf16.msra.mxu0 %v417
    %520 = vmatpush.bf16.msra.mxu0 %v409
    %521 = vmatpush.bf16.msra.mxu0 %v401
    %522 = vmatpush.bf16.msra.mxu0 %v393
    %523 = vmatpush.bf16.msra.mxu0 %v385
    %524 = vmatpush.bf16.msra.mxu0 %v377
    %525 = vmatmul.bf16.gmra.mxu0 %v101
    %v526 = vpop.f32.mrf.mxu0
    %v527 = vadd.f32 %v169, %v526
    %v528 = vpop.f32.mrf.mxu0
    %529 = vdwg.mxu0
    %530 = vmatpush.bf16.msra.mxu0 %v434
    %531 = vmatpush.bf16.msra.mxu0 %v426
    %532 = vmatpush.bf16.msra.mxu0 %v418
    %533 = vmatpush.bf16.msra.mxu0 %v410
    %534 = vmatpush.bf16.msra.mxu0 %v402
    %535 = vmatpush.bf16.msra.mxu0 %v394
    %536 = vmatpush.bf16.msra.mxu0 %v386
    %537 = vmatpush.bf16.msra.mxu0 %v378
    %538 = vmatmul.bf16.gmra.mxu0 %v101
    %v539 = vpop.f32.mrf.mxu0
    %v540 = vadd.f32 %v170, %v539
    %v541 = vpop.f32.mrf.mxu0
    %542 = vdwg.mxu0
    %543 = vmatpush.bf16.msra.mxu0 %v435
    %544 = vmatpush.bf16.msra.mxu0 %v427
    %545 = vmatpush.bf16.msra.mxu0 %v419
    %546 = vmatpush.bf16.msra.mxu0 %v411
    %547 = vmatpush.bf16.msra.mxu0 %v403
    %548 = vmatpush.bf16.msra.mxu0 %v395
    %549 = vmatpush.bf16.msra.mxu0 %v387
    %550 = vmatpush.bf16.msra.mxu0 %v379
    %551 = vmatmul.bf16.gmra.mxu0 %v101
    %v552 = vpop.f32.mrf.mxu0
    %v553 = vadd.f32 %v171, %v552
    %v554 = vpop.f32.mrf.mxu0
    %555 = vdwg.mxu0
    %556 = vmatpush.bf16.msra.mxu0 %v436
    %557 = vmatpush.bf16.msra.mxu0 %v428
    %558 = vmatpush.bf16.msra.mxu0 %v420
    %559 = vmatpush.bf16.msra.mxu0 %v412
    %560 = vmatpush.bf16.msra.mxu0 %v404
    %561 = vmatpush.bf16.msra.mxu0 %v396
    %562 = vmatpush.bf16.msra.mxu0 %v388
    %563 = vmatpush.bf16.msra.mxu0 %v380
    %564 = vmatmul.bf16.gmra.mxu0 %v101
    %v565 = vpop.f32.mrf.mxu0
    %v566 = vadd.f32 %v172, %v565
    %v567 = vpop.f32.mrf.mxu0
    %568 = vdwg.mxu0
    %569 = vmatpush.bf16.msra.mxu0 %v437
    %570 = vmatpush.bf16.msra.mxu0 %v429
    %571 = vmatpush.bf16.msra.mxu0 %v421
    %572 = vmatpush.bf16.msra.mxu0 %v413
    %573 = vmatpush.bf16.msra.mxu0 %v405
    %574 = vmatpush.bf16.msra.mxu0 %v397
    %575 = vmatpush.bf16.msra.mxu0 %v389
    %576 = vmatpush.bf16.msra.mxu0 %v381
    %577 = vmatmul.bf16.gmra.mxu0 %v101
    %v578 = vpop.f32.mrf.mxu0
    %v579 = vadd.f32 %v173, %v578
    %v580 = vpop.f32.mrf.mxu0
    %581 = vdwg.mxu0
    %582 = vmatpush.bf16.msra.mxu0 %v438
    %583 = vmatpush.bf16.msra.mxu0 %v430
    %584 = vmatpush.bf16.msra.mxu0 %v422
    %585 = vmatpush.bf16.msra.mxu0 %v414
    %586 = vmatpush.bf16.msra.mxu0 %v406
    %587 = vmatpush.bf16.msra.mxu0 %v398
    %588 = vmatpush.bf16.msra.mxu0 %v390
    %589 = vmatpush.bf16.msra.mxu0 %v382
    %590 = vmatmul.bf16.gmra.mxu0 %v101
    %v591 = vpop.f32.mrf.mxu0
    %v592 = vadd.f32 %v174, %v591
    %v593 = vpop.f32.mrf.mxu0
    %594 = vdwg.mxu0
    %595 = vmatpush.bf16.msra.mxu0 %v439
    %596 = vmatpush.bf16.msra.mxu0 %v431
    %597 = vmatpush.bf16.msra.mxu0 %v423
    %598 = vmatpush.bf16.msra.mxu0 %v415
    %599 = vmatpush.bf16.msra.mxu0 %v407
    %600 = vmatpush.bf16.msra.mxu0 %v399
    %601 = vmatpush.bf16.msra.mxu0 %v391
    %602 = vmatpush.bf16.msra.mxu0 %v383
    %603 = vmatmul.bf16.gmra.mxu0 %v101
    %v604 = vpop.f32.mrf.mxu0
    %v605 = vadd.f32 %v175, %v604
    %v606 = vpop.f32.mrf.mxu0
    %607 = vdwg.mxu0
    %v608 = vmax.f32 %v514, 0.0
    %v609 = vmax.f32 %v527, 0.0
    %v610 = vmax.f32 %v540, 0.0
    %v611 = vmax.f32 %v553, 0.0
    %v612 = vmax.f32 %v566, 0.0
    %v613 = vmax.f32 %v579, 0.0
    %v614 = vmax.f32 %v592, 0.0
    %v615 = vmax.f32 %v605, 0.0
    %v616 = vpack.c.bf16 %v608, %v608
    %v617 = vpack.c.bf16 %v609, %v609
    %v618 = vpack.c.bf16 %v610, %v610
    %v619 = vpack.c.bf16 %v611, %v611
    %v620 = vpack.c.bf16 %v613, %v612
    %v621 = vpack.c.bf16 %v615, %v614
    %v622 = vld [vmem:[#allocation8] sm:$0xff]
    %v623 = vld [vmem:[#allocation8 + $0x8] sm:$0xff]
    %v624 = vld [vmem:[#allocation8 + $0x10] sm:$0xff]
    %v625 = vld [vmem:[#allocation8 + $0x18] sm:$0xff]
    %v626 = vld [vmem:[#allocation8 + $0x20] sm:$0xff]
    %v627 = vld [vmem:[#allocation8 + $0x28] sm:$0xff]
    %v628 = vld [vmem:[#allocation8 + $0x30] sm:$0xff]
    %v629 = vld [vmem:[#allocation8 + $0x38] sm:$0xff]
    %v630 = vld [vmem:[#allocation8 + $0x40] sm:$0xff]
    %v631 = vld [vmem:[#allocation8 + $0x48] sm:$0xff]
    %v632 = vld [vmem:[#allocation8 + $0x50] sm:$0xff]
    %v633 = vld [vmem:[#allocation8 + $0x58] sm:$0xff]
    %v634 = vld [vmem:[#allocation8 + $0x60] sm:$0xff]
    %v635 = vld [vmem:[#allocation8 + $0x68] sm:$0xff]
    %v636 = vld [vmem:[#allocation8 + $0x70] sm:$0xff]
    %v637 = vld [vmem:[#allocation8 + $0x78] sm:$0xff]
    %v638 = vld [vmem:[#allocation8 + $0x80] sm:$0xff]
    %v639 = vld [vmem:[#allocation8 + $0x88] sm:$0xff]
    %v640 = vld [vmem:[#allocation8 + $0x90] sm:$0xff]
    %v641 = vld [vmem:[#allocation8 + $0x98] sm:$0xff]
    %v642 = vld [vmem:[#allocation8 + $0xa0] sm:$0xff]
    %v643 = vld [vmem:[#allocation8 + $0xa8] sm:$0xff]
    %v644 = vld [vmem:[#allocation8 + $0xb0] sm:$0xff]
    %v645 = vld [vmem:[#allocation8 + $0xb8] sm:$0xff]
    %v646 = vld [vmem:[#allocation8 + $0xc0] sm:$0xff]
    %v647 = vld [vmem:[#allocation8 + $0xc8] sm:$0xff]
    %v648 = vld [vmem:[#allocation8 + $0xd0] sm:$0xff]
    %v649 = vld [vmem:[#allocation8 + $0xd8] sm:$0xff]
    %v650 = vld [vmem:[#allocation8 + $0xe0] sm:$0xff]
    %v651 = vld [vmem:[#allocation8 + $0xe8] sm:$0xff]
    %v652 = vld [vmem:[#allocation8 + $0xf0] sm:$0xff]
    %v653 = vld [vmem:[#allocation8 + $0xf8] sm:$0xff]
    %v654 = vld [vmem:[#allocation8 + $0x100] sm:$0xff]
    %v655 = vld [vmem:[#allocation8 + $0x108] sm:$0xff]
    %v656 = vld [vmem:[#allocation8 + $0x110] sm:$0xff]
    %v657 = vld [vmem:[#allocation8 + $0x118] sm:$0xff]
    %v658 = vld [vmem:[#allocation8 + $0x120] sm:$0xff]
    %v659 = vld [vmem:[#allocation8 + $0x128] sm:$0xff]
    %v660 = vld [vmem:[#allocation8 + $0x130] sm:$0xff]
    %v661 = vld [vmem:[#allocation8 + $0x138] sm:$0xff]
    %v662 = vld [vmem:[#allocation8 + $0x140] sm:$0xff]
    %v663 = vld [vmem:[#allocation8 + $0x148] sm:$0xff]
    %v664 = vld [vmem:[#allocation8 + $0x150] sm:$0xff]
    %v665 = vld [vmem:[#allocation8 + $0x158] sm:$0xff]
    %v666 = vld [vmem:[#allocation8 + $0x160] sm:$0xff]
    %v667 = vld [vmem:[#allocation8 + $0x168] sm:$0xff]
    %v668 = vld [vmem:[#allocation8 + $0x170] sm:$0xff]
    %v669 = vld [vmem:[#allocation8 + $0x178] sm:$0xff]
    %v670 = vld [vmem:[#allocation8 + $0x180] sm:$0xff]
    %v671 = vld [vmem:[#allocation8 + $0x188] sm:$0xff]
    %v672 = vld [vmem:[#allocation8 + $0x190] sm:$0xff]
    %v673 = vld [vmem:[#allocation8 + $0x198] sm:$0xff]
    %v674 = vld [vmem:[#allocation8 + $0x1a0] sm:$0xff]
    %v675 = vld [vmem:[#allocation8 + $0x1a8] sm:$0xff]
    %v676 = vld [vmem:[#allocation8 + $0x1b0] sm:$0xff]
    %v677 = vld [vmem:[#allocation8 + $0x1b8] sm:$0xff]
    %v678 = vld [vmem:[#allocation8 + $0x1c0] sm:$0xff]
    %v679 = vld [vmem:[#allocation8 + $0x1c8] sm:$0xff]
    %v680 = vld [vmem:[#allocation8 + $0x1d0] sm:$0xff]
    %v681 = vld [vmem:[#allocation8 + $0x1d8] sm:$0xff]
    %v682 = vld [vmem:[#allocation8 + $0x1e0] sm:$0xff]
    %v683 = vld [vmem:[#allocation8 + $0x1e8] sm:$0xff]
    %v684 = vld [vmem:[#allocation8 + $0x1f0] sm:$0xff]
    %v685 = vld [vmem:[#allocation8 + $0x1f8] sm:$0xff]
    %v686 = vld [vmem:[%s4] sm:$0x3]
    %v688 = vperm.slane %v686, 0
    %v689 = vperm.slane %v686, 1
    %v756 = vunpack.c.l.b16 %v622
    %v757 = vunpack.c.h.b16 %v622
    %v758 = vunpack.c.l.b16 %v623
    %v759 = vunpack.c.h.b16 %v623
    %v760 = vunpack.c.l.b16 %v624
    %v761 = vunpack.c.h.b16 %v624
    %v762 = vunpack.c.l.b16 %v625
    %v763 = vunpack.c.h.b16 %v625
    %v764 = vunpack.c.l.b16 %v626
    %v765 = vunpack.c.h.b16 %v626
    %v766 = vunpack.c.l.b16 %v627
    %v767 = vunpack.c.h.b16 %v627
    %v768 = vunpack.c.l.b16 %v628
    %v769 = vunpack.c.h.b16 %v628
    %v770 = vunpack.c.l.b16 %v629
    %v771 = vunpack.c.h.b16 %v629
    %v772 = vunpack.c.l.b16 %v630
    %v773 = vunpack.c.h.b16 %v630
    %v774 = vunpack.c.l.b16 %v631
    %v775 = vunpack.c.h.b16 %v631
    %v776 = vunpack.c.l.b16 %v632
    %v777 = vunpack.c.h.b16 %v632
    %v778 = vunpack.c.l.b16 %v633
    %v779 = vunpack.c.h.b16 %v633
    %v780 = vunpack.c.l.b16 %v634
    %v781 = vunpack.c.h.b16 %v634
    %v782 = vunpack.c.l.b16 %v635
    %v783 = vunpack.c.h.b16 %v635
    %v784 = vunpack.c.l.b16 %v636
    %v785 = vunpack.c.h.b16 %v636
    %v786 = vunpack.c.l.b16 %v637
    %v787 = vunpack.c.h.b16 %v637
    %v788 = vunpack.c.l.b16 %v638
    %v789 = vunpack.c.h.b16 %v638
    %v790 = vunpack.c.l.b16 %v639
    %v791 = vunpack.c.h.b16 %v639
    %v792 = vunpack.c.l.b16 %v640
    %v793 = vunpack.c.h.b16 %v640
    %v794 = vunpack.c.l.b16 %v641
    %v795 = vunpack.c.h.b16 %v641
    %v796 = vunpack.c.l.b16 %v642
    %v797 = vunpack.c.h.b16 %v642
    %v798 = vunpack.c.l.b16 %v643
    %v799 = vunpack.c.h.b16 %v643
    %v800 = vunpack.c.l.b16 %v644
    %v801 = vunpack.c.h.b16 %v644
    %v802 = vunpack.c.l.b16 %v645
    %v803 = vunpack.c.h.b16 %v645
    %v804 = vunpack.c.l.b16 %v646
    %v805 = vunpack.c.h.b16 %v646
    %v806 = vunpack.c.l.b16 %v647
    %v807 = vunpack.c.h.b16 %v647
    %v808 = vunpack.c.l.b16 %v648
    %v809 = vunpack.c.h.b16 %v648
    %v810 = vunpack.c.l.b16 %v649
    %v811 = vunpack.c.h.b16 %v649
    %v812 = vunpack.c.l.b16 %v650
    %v813 = vunpack.c.h.b16 %v650
    %v814 = vunpack.c.l.b16 %v651
    %v815 = vunpack.c.h.b16 %v651
    %v816 = vunpack.c.l.b16 %v652
    %v817 = vunpack.c.h.b16 %v652
    %v818 = vunpack.c.l.b16 %v653
    %v819 = vunpack.c.h.b16 %v653
    %v820 = vunpack.c.l.b16 %v654
    %v821 = vunpack.c.h.b16 %v654
    %v822 = vunpack.c.l.b16 %v655
    %v823 = vunpack.c.h.b16 %v655
    %v824 = vunpack.c.l.b16 %v656
    %v825 = vunpack.c.h.b16 %v656
    %v826 = vunpack.c.l.b16 %v657
    %v827 = vunpack.c.h.b16 %v657
    %v828 = vunpack.c.l.b16 %v658
    %v829 = vunpack.c.h.b16 %v658
    %v830 = vunpack.c.l.b16 %v659
    %v831 = vunpack.c.h.b16 %v659
    %v832 = vunpack.c.l.b16 %v660
    %v833 = vunpack.c.h.b16 %v660
    %v834 = vunpack.c.l.b16 %v661
    %v835 = vunpack.c.h.b16 %v661
    %v836 = vunpack.c.l.b16 %v662
    %v837 = vunpack.c.h.b16 %v662
    %v838 = vunpack.c.l.b16 %v663
    %v839 = vunpack.c.h.b16 %v663
    %v840 = vunpack.c.l.b16 %v664
    %v841 = vunpack.c.h.b16 %v664
    %v842 = vunpack.c.l.b16 %v665
    %v843 = vunpack.c.h.b16 %v665
    %v844 = vunpack.c.l.b16 %v666
    %v845 = vunpack.c.h.b16 %v666
    %v846 = vunpack.c.l.b16 %v667
    %v847 = vunpack.c.h.b16 %v667
    %v848 = vunpack.c.l.b16 %v668
    %v849 = vunpack.c.h.b16 %v668
    %v850 = vunpack.c.l.b16 %v669
    %v851 = vunpack.c.h.b16 %v669
    %v852 = vunpack.c.l.b16 %v670
    %v853 = vunpack.c.h.b16 %v670
    %v854 = vunpack.c.l.b16 %v671
    %v855 = vunpack.c.h.b16 %v671
    %v856 = vunpack.c.l.b16 %v672
    %v857 = vunpack.c.h.b16 %v672
    %v858 = vunpack.c.l.b16 %v673
    %v859 = vunpack.c.h.b16 %v673
    %v860 = vunpack.c.l.b16 %v674
    %v861 = vunpack.c.h.b16 %v674
    %v862 = vunpack.c.l.b16 %v675
    %v863 = vunpack.c.h.b16 %v675
    %v864 = vunpack.c.l.b16 %v676
    %v865 = vunpack.c.h.b16 %v676
    %v866 = vunpack.c.l.b16 %v677
    %v867 = vunpack.c.h.b16 %v677
    %v868 = vunpack.c.l.b16 %v678
    %v869 = vunpack.c.h.b16 %v678
    %v870 = vunpack.c.l.b16 %v679
    %v871 = vunpack.c.h.b16 %v679
    %v872 = vunpack.c.l.b16 %v680
    %v873 = vunpack.c.h.b16 %v680
    %v874 = vunpack.c.l.b16 %v681
    %v875 = vunpack.c.h.b16 %v681
    %v876 = vunpack.c.l.b16 %v682
    %v877 = vunpack.c.h.b16 %v682
    %v878 = vunpack.c.l.b16 %v683
    %v879 = vunpack.c.h.b16 %v683
    %v880 = vunpack.c.l.b16 %v684
    %v881 = vunpack.c.h.b16 %v684
    %v882 = vunpack.c.l.b16 %v685
    %v883 = vunpack.c.h.b16 %v685
    %v884 = vpack.c.b16 %v758, %v756
    %v885 = vpack.c.b16 %v759, %v757
    %v886 = vpack.c.b16 %v762, %v760
    %v887 = vpack.c.b16 %v763, %v761
    %v888 = vpack.c.b16 %v766, %v764
    %v889 = vpack.c.b16 %v767, %v765
    %v890 = vpack.c.b16 %v770, %v768
    %v891 = vpack.c.b16 %v771, %v769
    %v892 = vpack.c.b16 %v774, %v772
    %v893 = vpack.c.b16 %v775, %v773
    %v894 = vpack.c.b16 %v778, %v776
    %v895 = vpack.c.b16 %v779, %v777
    %v896 = vpack.c.b16 %v782, %v780
    %v897 = vpack.c.b16 %v783, %v781
    %v898 = vpack.c.b16 %v786, %v784
    %v899 = vpack.c.b16 %v787, %v785
    %v900 = vpack.c.b16 %v790, %v788
    %v901 = vpack.c.b16 %v791, %v789
    %v902 = vpack.c.b16 %v794, %v792
    %v903 = vpack.c.b16 %v795, %v793
    %v904 = vpack.c.b16 %v798, %v796
    %v905 = vpack.c.b16 %v799, %v797
    %v906 = vpack.c.b16 %v802, %v800
    %v907 = vpack.c.b16 %v803, %v801
    %v908 = vpack.c.b16 %v806, %v804
    %v909 = vpack.c.b16 %v807, %v805
    %v910 = vpack.c.b16 %v810, %v808
    %v911 = vpack.c.b16 %v811, %v809
    %v912 = vpack.c.b16 %v814, %v812
    %v913 = vpack.c.b16 %v815, %v813
    %v914 = vpack.c.b16 %v818, %v816
    %v915 = vpack.c.b16 %v819, %v817
    %v916 = vpack.c.b16 %v822, %v820
    %v917 = vpack.c.b16 %v823, %v821
    %v918 = vpack.c.b16 %v826, %v824
    %v919 = vpack.c.b16 %v827, %v825
    %v920 = vpack.c.b16 %v830, %v828
    %v921 = vpack.c.b16 %v831, %v829
    %v922 = vpack.c.b16 %v834, %v832
    %v923 = vpack.c.b16 %v835, %v833
    %v924 = vpack.c.b16 %v838, %v836
    %v925 = vpack.c.b16 %v839, %v837
    %v926 = vpack.c.b16 %v842, %v840
    %v927 = vpack.c.b16 %v843, %v841
    %v928 = vpack.c.b16 %v846, %v844
    %v929 = vpack.c.b16 %v847, %v845
    %v930 = vpack.c.b16 %v850, %v848
    %v931 = vpack.c.b16 %v851, %v849
    %v932 = vpack.c.b16 %v854, %v852
    %v933 = vpack.c.b16 %v855, %v853
    %v934 = vpack.c.b16 %v858, %v856
    %v935 = vpack.c.b16 %v859, %v857
    %v936 = vpack.c.b16 %v862, %v860
    %v937 = vpack.c.b16 %v863, %v861
    %v938 = vpack.c.b16 %v866, %v864
    %v939 = vpack.c.b16 %v867, %v865
    %v940 = vpack.c.b16 %v870, %v868
    %v941 = vpack.c.b16 %v871, %v869
    %v942 = vpack.c.b16 %v874, %v872
    %v943 = vpack.c.b16 %v875, %v873
    %v944 = vpack.c.b16 %v878, %v876
    %v945 = vpack.c.b16 %v879, %v877
    %v946 = vpack.c.b16 %v882, %v880
    %v947 = vpack.c.b16 %v883, %v881
    %1012 = vmatpush.bf16.msra.mxu0 %v898
    %1013 = vmatpush.bf16.msra.mxu0 %v896
    %1014 = vmatpush.bf16.msra.mxu0 %v894
    %1015 = vmatpush.bf16.msra.mxu0 %v892
    %1016 = vmatpush.bf16.msra.mxu0 %v890
    %1017 = vmatpush.bf16.msra.mxu0 %v888
    %1018 = vmatpush.bf16.msra.mxu0 %v886
    %1019 = vmatpush.bf16.msra.mxu0 %v884
    %1020 = vmatmul.bf16.gmra.mxu0 %v616
    %v1021 = vpop.f32.mrf.mxu0
    %v1022 = vadd.f32 %v688, %v1021
    %v1023 = vpop.f32.mrf.mxu0
    %1024 = vdwg.mxu0
    %1025 = vmatpush.bf16.msra.mxu0 %v914
    %1026 = vmatpush.bf16.msra.mxu0 %v912
    %1027 = vmatpush.bf16.msra.mxu0 %v910
    %1028 = vmatpush.bf16.msra.mxu0 %v908
    %1029 = vmatpush.bf16.msra.mxu0 %v906
    %1030 = vmatpush.bf16.msra.mxu0 %v904
    %1031 = vmatpush.bf16.msra.mxu0 %v902
    %1032 = vmatpush.bf16.msra.mxu0 %v900
    %1033 = vmatmul.bf16.gmra.mxu0 %v617
    %v1034 = vpop.f32.mrf.mxu0
    %v1035 = vadd.f32 %v1022, %v1034
    %v1036 = vpop.f32.mrf.mxu0
    %1037 = vdwg.mxu0
    %1038 = vmatpush.bf16.msra.mxu0 %v930
    %1039 = vmatpush.bf16.msra.mxu0 %v928
    %1040 = vmatpush.bf16.msra.mxu0 %v926
    %1041 = vmatpush.bf16.msra.mxu0 %v924
    %1042 = vmatpush.bf16.msra.mxu0 %v922
    %1043 = vmatpush.bf16.msra.mxu0 %v920
    %1044 = vmatpush.bf16.msra.mxu0 %v918
    %1045 = vmatpush.bf16.msra.mxu0 %v916
    %1046 = vmatmul.bf16.gmra.mxu0 %v618
    %v1047 = vpop.f32.mrf.mxu0
    %v1048 = vadd.f32 %v1035, %v1047
    %v1049 = vpop.f32.mrf.mxu0
    %1050 = vdwg.mxu0
    %1051 = vmatpush.bf16.msra.mxu0 %v946
    %1052 = vmatpush.bf16.msra.mxu0 %v944
    %1053 = vmatpush.bf16.msra.mxu0 %v942
    %1054 = vmatpush.bf16.msra.mxu0 %v940
    %1055 = vmatpush.bf16.msra.mxu0 %v938
    %1056 = vmatpush.bf16.msra.mxu0 %v936
    %1057 = vmatpush.bf16.msra.mxu0 %v934
    %1058 = vmatpush.bf16.msra.mxu0 %v932
    %1059 = vmatmul.bf16.gmra.mxu0 %v619
    %v1060 = vpop.f32.mrf.mxu0
    %v1061 = vadd.f32 %v1048, %v1060
    %v1062 = vpop.f32.mrf.mxu0
    %1063 = vdwg.mxu0
    %1064 = vmatpush.bf16.msra.mxu0 %v899
    %1065 = vmatpush.bf16.msra.mxu0 %v897
    %1066 = vmatpush.bf16.msra.mxu0 %v895
    %1067 = vmatpush.bf16.msra.mxu0 %v893
    %1068 = vmatpush.bf16.msra.mxu0 %v891
    %1069 = vmatpush.bf16.msra.mxu0 %v889
    %1070 = vmatpush.bf16.msra.mxu0 %v887
    %1071 = vmatpush.bf16.msra.mxu0 %v885
    %1072 = vmatmul.bf16.gmra.mxu0 %v616
    %v1073 = vpop.f32.mrf.mxu0
    %v1074 = vadd.f32 %v689, %v1073
    %v1075 = vpop.f32.mrf.mxu0
    %1076 = vdwg.mxu0
    %1077 = vmatpush.bf16.msra.mxu0 %v915
    %1078 = vmatpush.bf16.msra.mxu0 %v913
    %1079 = vmatpush.bf16.msra.mxu0 %v911
    %1080 = vmatpush.bf16.msra.mxu0 %v909
    %1081 = vmatpush.bf16.msra.mxu0 %v907
    %1082 = vmatpush.bf16.msra.mxu0 %v905
    %1083 = vmatpush.bf16.msra.mxu0 %v903
    %1084 = vmatpush.bf16.msra.mxu0 %v901
    %1085 = vmatmul.bf16.gmra.mxu0 %v617
    %v1086 = vpop.f32.mrf.mxu0
    %v1087 = vadd.f32 %v1074, %v1086
    %v1088 = vpop.f32.mrf.mxu0
    %1089 = vdwg.mxu0
    %1090 = vmatpush.bf16.msra.mxu0 %v931
    %1091 = vmatpush.bf16.msra.mxu0 %v929
    %1092 = vmatpush.bf16.msra.mxu0 %v927
    %1093 = vmatpush.bf16.msra.mxu0 %v925
    %1094 = vmatpush.bf16.msra.mxu0 %v923
    %1095 = vmatpush.bf16.msra.mxu0 %v921
    %1096 = vmatpush.bf16.msra.mxu0 %v919
    %1097 = vmatpush.bf16.msra.mxu0 %v917
    %1098 = vmatmul.bf16.gmra.mxu0 %v618
    %v1099 = vpop.f32.mrf.mxu0
    %v1100 = vadd.f32 %v1087, %v1099
    %v1101 = vpop.f32.mrf.mxu0
    %1102 = vdwg.mxu0
    %1103 = vmatpush.bf16.msra.mxu0 %v947
    %1104 = vmatpush.bf16.msra.mxu0 %v945
    %1105 = vmatpush.bf16.msra.mxu0 %v943
    %1106 = vmatpush.bf16.msra.mxu0 %v941
    %1107 = vmatpush.bf16.msra.mxu0 %v939
    %1108 = vmatpush.bf16.msra.mxu0 %v937
    %1109 = vmatpush.bf16.msra.mxu0 %v935
    %1110 = vmatpush.bf16.msra.mxu0 %v933
    %1111 = vmatmul.bf16.gmra.mxu0 %v619
    %v1112 = vpop.f32.mrf.mxu0
    %v1113 = vadd.f32 %v1100, %v1112
    %v1114 = vpop.f32.mrf.mxu0
    %1115 = vdwg.mxu0
    %v1116 = vmax.f32 %v1061, 0.0
    %v1117 = vmax.f32 %v1113, 0.0
    %v1118 = vpack.c.bf16 %v1117, %v1116
    %v1120 = vunpack.c.l.b16 %v1118
    %v1121 = vunpack.c.h.b16 %v1118
    %v1122 = vpack.c.b16 %v1120, %v1120
    %v1123 = vpack.c.b16 %v1121, %v1121
    %v1128 = vunpack.c.l.b16 %v620
    %v1129 = vunpack.c.h.b16 %v620
    %v1130 = vunpack.c.l.b16 %v621
    %v1131 = vunpack.c.h.b16 %v621
    %v1132 = vpack.c.b16 %v1128, %v1128
    %v1133 = vpack.c.b16 %v1129, %v1129
    %v1134 = vpack.c.b16 %v1130, %v1130
    %v1135 = vpack.c.b16 %v1131, %v1131
    %v1140 = vld [vmem:[#allocation10] sm:$0xf]
    %v1141 = vld [vmem:[#allocation10 + $0x4] sm:$0xf]
    %v1142 = vld [vmem:[#allocation10 + $0x8] sm:$0xf]
    %v1143 = vld [vmem:[#allocation10 + $0xc] sm:$0xf]
    %v1144 = vld [vmem:[#allocation10 + $0x10] sm:$0xf]
    %v1145 = vld [vmem:[#allocation10 + $0x14] sm:$0xf]
    %v1146 = vld [vmem:[#allocation10 + $0x18] sm:$0xf]
    %v1147 = vld [vmem:[#allocation10 + $0x1c] sm:$0xf]
    %v1148 = vld [vmem:[#allocation10 + $0x20] sm:$0xf]
    %v1149 = vld [vmem:[#allocation10 + $0x24] sm:$0xf]
    %v1150 = vld [vmem:[#allocation10 + $0x28] sm:$0xf]
    %v1151 = vld [vmem:[#allocation10 + $0x2c] sm:$0xf]
    %v1152 = vld [vmem:[#allocation10 + $0x30] sm:$0xf]
    %v1153 = vld [vmem:[#allocation10 + $0x34] sm:$0xf]
    %v1154 = vld [vmem:[#allocation10 + $0x38] sm:$0xf]
    %v1155 = vld [vmem:[#allocation10 + $0x3c] sm:$0xf]
    %v1156 = vld [vmem:[#allocation10 + $0x40] sm:$0xf]
    %v1157 = vld [vmem:[#allocation10 + $0x44] sm:$0xf]
    %v1158 = vld [vmem:[#allocation10 + $0x48] sm:$0xf]
    %v1159 = vld [vmem:[#allocation10 + $0x4c] sm:$0xf]
    %v1160 = vld [vmem:[#allocation10 + $0x50] sm:$0xf]
    %v1161 = vld [vmem:[#allocation10 + $0x54] sm:$0xf]
    %v1162 = vld [vmem:[#allocation10 + $0x58] sm:$0xf]
    %v1163 = vld [vmem:[#allocation10 + $0x5c] sm:$0xf]
    %v1164 = vld [vmem:[#allocation10 + $0x60] sm:$0xf]
    %v1165 = vld [vmem:[#allocation10 + $0x64] sm:$0xf]
    %v1166 = vld [vmem:[#allocation10 + $0x68] sm:$0xf]
    %v1167 = vld [vmem:[#allocation10 + $0x6c] sm:$0xf]
    %v1168 = vld [vmem:[#allocation10 + $0x70] sm:$0xf]
    %v1169 = vld [vmem:[#allocation10 + $0x74] sm:$0xf]
    %v1170 = vld [vmem:[#allocation10 + $0x78] sm:$0xf]
    %v1171 = vld [vmem:[#allocation10 + $0x7c] sm:$0xf]
    %v1172 = vld [vmem:[#allocation10 + $0x80] sm:$0xf]
    %v1173 = vld [vmem:[#allocation10 + $0x84] sm:$0xf]
    %v1174 = vld [vmem:[#allocation10 + $0x88] sm:$0xf]
    %v1175 = vld [vmem:[#allocation10 + $0x8c] sm:$0xf]
    %v1176 = vld [vmem:[#allocation10 + $0x90] sm:$0xf]
    %v1177 = vld [vmem:[#allocation10 + $0x94] sm:$0xf]
    %v1178 = vld [vmem:[#allocation10 + $0x98] sm:$0xf]
    %v1179 = vld [vmem:[#allocation10 + $0x9c] sm:$0xf]
    %v1180 = vld [vmem:[#allocation10 + $0xa0] sm:$0xf]
    %v1181 = vld [vmem:[#allocation10 + $0xa4] sm:$0xf]
    %v1182 = vld [vmem:[#allocation10 + $0xa8] sm:$0xf]
    %v1183 = vld [vmem:[#allocation10 + $0xac] sm:$0xf]
    %v1184 = vld [vmem:[#allocation10 + $0xb0] sm:$0xf]
    %v1185 = vld [vmem:[#allocation10 + $0xb4] sm:$0xf]
    %v1186 = vld [vmem:[#allocation10 + $0xb8] sm:$0xf]
    %v1187 = vld [vmem:[#allocation10 + $0xbc] sm:$0xf]
    %v1188 = vld [vmem:[#allocation10 + $0xc0] sm:$0xf]
    %v1189 = vld [vmem:[#allocation10 + $0xc4] sm:$0xf]
    %v1190 = vld [vmem:[#allocation10 + $0xc8] sm:$0xf]
    %v1191 = vld [vmem:[#allocation10 + $0xcc] sm:$0xf]
    %v1192 = vld [vmem:[#allocation10 + $0xd0] sm:$0xf]
    %v1193 = vld [vmem:[#allocation10 + $0xd4] sm:$0xf]
    %v1194 = vld [vmem:[#allocation10 + $0xd8] sm:$0xf]
    %v1195 = vld [vmem:[#allocation10 + $0xdc] sm:$0xf]
    %v1196 = vld [vmem:[#allocation10 + $0xe0] sm:$0xf]
    %v1197 = vld [vmem:[#allocation10 + $0xe4] sm:$0xf]
    %v1198 = vld [vmem:[#allocation10 + $0xe8] sm:$0xf]
    %v1199 = vld [vmem:[#allocation10 + $0xec] sm:$0xf]
    %v1200 = vld [vmem:[#allocation10 + $0xf0] sm:$0xf]
    %v1201 = vld [vmem:[#allocation10 + $0xf4] sm:$0xf]
    %v1202 = vld [vmem:[#allocation10 + $0xf8] sm:$0xf]
    %v1203 = vld [vmem:[#allocation10 + $0xfc] sm:$0xf]
    %v1204 = vld [vmem:[#allocation10 + $0x100] sm:$0xf]
    %v1205 = vld [vmem:[#allocation10 + $0x104] sm:$0xf]
    %v1206 = vld [vmem:[#allocation10 + $0x108] sm:$0xf]
    %v1207 = vld [vmem:[#allocation10 + $0x10c] sm:$0xf]
    %v1208 = vld [vmem:[#allocation10 + $0x110] sm:$0xf]
    %v1209 = vld [vmem:[#allocation10 + $0x114] sm:$0xf]
    %v1210 = vld [vmem:[#allocation10 + $0x118] sm:$0xf]
    %v1211 = vld [vmem:[#allocation10 + $0x11c] sm:$0xf]
    %v1212 = vld [vmem:[#allocation10 + $0x120] sm:$0xf]
    %v1213 = vld [vmem:[#allocation10 + $0x124] sm:$0xf]
    %v1214 = vld [vmem:[#allocation10 + $0x128] sm:$0xf]
    %v1215 = vld [vmem:[#allocation10 + $0x12c] sm:$0xf]
    %v1216 = vld [vmem:[#allocation10 + $0x130] sm:$0xf]
    %v1217 = vld [vmem:[#allocation10 + $0x134] sm:$0xf]
    %v1218 = vld [vmem:[#allocation10 + $0x138] sm:$0xf]
    %v1219 = vld [vmem:[#allocation10 + $0x13c] sm:$0xf]
    %v1220 = vld [vmem:[#allocation10 + $0x140] sm:$0xf]
    %v1221 = vld [vmem:[#allocation10 + $0x144] sm:$0xf]
    %v1222 = vld [vmem:[#allocation10 + $0x148] sm:$0xf]
    %v1223 = vld [vmem:[#allocation10 + $0x14c] sm:$0xf]
    %v1224 = vld [vmem:[#allocation10 + $0x150] sm:$0xf]
    %v1225 = vld [vmem:[#allocation10 + $0x154] sm:$0xf]
    %v1226 = vld [vmem:[#allocation10 + $0x158] sm:$0xf]
    %v1227 = vld [vmem:[#allocation10 + $0x15c] sm:$0xf]
    %v1228 = vld [vmem:[#allocation10 + $0x160] sm:$0xf]
    %v1229 = vld [vmem:[#allocation10 + $0x164] sm:$0xf]
    %v1230 = vld [vmem:[#allocation10 + $0x168] sm:$0xf]
    %v1231 = vld [vmem:[#allocation10 + $0x16c] sm:$0xf]
    %v1232 = vld [vmem:[#allocation10 + $0x170] sm:$0xf]
    %v1233 = vld [vmem:[#allocation10 + $0x174] sm:$0xf]
    %v1234 = vld [vmem:[#allocation10 + $0x178] sm:$0xf]
    %v1235 = vld [vmem:[#allocation10 + $0x17c] sm:$0xf]
    %v1236 = vld [vmem:[%s6] sm:$0x1]
    %v1238 = vperm.slane %v1236, 0
    %v1336 = vunpack.c.l.b16 %v1140
    %v1337 = vunpack.c.l.b16 %v1141
    %v1338 = vunpack.c.l.b16 %v1142
    %v1339 = vunpack.c.l.b16 %v1143
    %v1340 = vunpack.c.l.b16 %v1144
    %v1341 = vunpack.c.l.b16 %v1145
    %v1342 = vunpack.c.l.b16 %v1146
    %v1343 = vunpack.c.l.b16 %v1147
    %v1344 = vunpack.c.l.b16 %v1148
    %v1345 = vunpack.c.l.b16 %v1149
    %v1346 = vunpack.c.l.b16 %v1150
    %v1347 = vunpack.c.l.b16 %v1151
    %v1348 = vunpack.c.l.b16 %v1152
    %v1349 = vunpack.c.l.b16 %v1153
    %v1350 = vunpack.c.l.b16 %v1154
    %v1351 = vunpack.c.l.b16 %v1155
    %v1352 = vunpack.c.l.b16 %v1156
    %v1353 = vunpack.c.l.b16 %v1157
    %v1354 = vunpack.c.l.b16 %v1158
    %v1355 = vunpack.c.l.b16 %v1159
    %v1356 = vunpack.c.l.b16 %v1160
    %v1357 = vunpack.c.l.b16 %v1161
    %v1358 = vunpack.c.l.b16 %v1162
    %v1359 = vunpack.c.l.b16 %v1163
    %v1360 = vunpack.c.l.b16 %v1164
    %v1361 = vunpack.c.l.b16 %v1165
    %v1362 = vunpack.c.l.b16 %v1166
    %v1363 = vunpack.c.l.b16 %v1167
    %v1364 = vunpack.c.l.b16 %v1168
    %v1365 = vunpack.c.l.b16 %v1169
    %v1366 = vunpack.c.l.b16 %v1170
    %v1367 = vunpack.c.l.b16 %v1171
    %v1368 = vunpack.c.l.b16 %v1172
    %v1369 = vunpack.c.l.b16 %v1173
    %v1370 = vunpack.c.l.b16 %v1174
    %v1371 = vunpack.c.l.b16 %v1175
    %v1372 = vunpack.c.l.b16 %v1176
    %v1373 = vunpack.c.l.b16 %v1177
    %v1374 = vunpack.c.l.b16 %v1178
    %v1375 = vunpack.c.l.b16 %v1179
    %v1376 = vunpack.c.l.b16 %v1180
    %v1377 = vunpack.c.l.b16 %v1181
    %v1378 = vunpack.c.l.b16 %v1182
    %v1379 = vunpack.c.l.b16 %v1183
    %v1380 = vunpack.c.l.b16 %v1184
    %v1381 = vunpack.c.l.b16 %v1185
    %v1382 = vunpack.c.l.b16 %v1186
    %v1383 = vunpack.c.l.b16 %v1187
    %v1384 = vunpack.c.l.b16 %v1188
    %v1385 = vunpack.c.l.b16 %v1189
    %v1386 = vunpack.c.l.b16 %v1190
    %v1387 = vunpack.c.l.b16 %v1191
    %v1388 = vunpack.c.l.b16 %v1192
    %v1389 = vunpack.c.l.b16 %v1193
    %v1390 = vunpack.c.l.b16 %v1194
    %v1391 = vunpack.c.l.b16 %v1195
    %v1392 = vunpack.c.l.b16 %v1196
    %v1393 = vunpack.c.l.b16 %v1197
    %v1394 = vunpack.c.l.b16 %v1198
    %v1395 = vunpack.c.l.b16 %v1199
    %v1396 = vunpack.c.l.b16 %v1200
    %v1397 = vunpack.c.l.b16 %v1201
    %v1398 = vunpack.c.l.b16 %v1202
    %v1399 = vunpack.c.l.b16 %v1203
    %v1400 = vunpack.c.l.b16 %v1204
    %v1401 = vunpack.c.l.b16 %v1205
    %v1402 = vunpack.c.l.b16 %v1206
    %v1403 = vunpack.c.l.b16 %v1207
    %v1404 = vunpack.c.l.b16 %v1208
    %v1405 = vunpack.c.l.b16 %v1209
    %v1406 = vunpack.c.l.b16 %v1210
    %v1407 = vunpack.c.l.b16 %v1211
    %v1408 = vunpack.c.l.b16 %v1212
    %v1409 = vunpack.c.l.b16 %v1213
    %v1410 = vunpack.c.l.b16 %v1214
    %v1411 = vunpack.c.l.b16 %v1215
    %v1412 = vunpack.c.l.b16 %v1216
    %v1413 = vunpack.c.l.b16 %v1217
    %v1414 = vunpack.c.l.b16 %v1218
    %v1415 = vunpack.c.l.b16 %v1219
    %v1416 = vunpack.c.l.b16 %v1220
    %v1417 = vunpack.c.l.b16 %v1221
    %v1418 = vunpack.c.l.b16 %v1222
    %v1419 = vunpack.c.l.b16 %v1223
    %v1420 = vunpack.c.l.b16 %v1224
    %v1421 = vunpack.c.l.b16 %v1225
    %v1422 = vunpack.c.l.b16 %v1226
    %v1423 = vunpack.c.l.b16 %v1227
    %v1424 = vunpack.c.l.b16 %v1228
    %v1425 = vunpack.c.l.b16 %v1229
    %v1426 = vunpack.c.l.b16 %v1230
    %v1427 = vunpack.c.l.b16 %v1231
    %v1428 = vunpack.c.l.b16 %v1232
    %v1429 = vunpack.c.l.b16 %v1233
    %v1430 = vunpack.c.l.b16 %v1234
    %v1431 = vunpack.c.l.b16 %v1235
    %v1432 = vpack.c.b16 %v1337, %v1336
    %v1433 = vpack.c.b16 %v1339, %v1338
    %v1434 = vpack.c.b16 %v1341, %v1340
    %v1435 = vpack.c.b16 %v1343, %v1342
    %v1436 = vpack.c.b16 %v1345, %v1344
    %v1437 = vpack.c.b16 %v1347, %v1346
    %v1438 = vpack.c.b16 %v1349, %v1348
    %v1439 = vpack.c.b16 %v1351, %v1350
    %v1440 = vpack.c.b16 %v1353, %v1352
    %v1441 = vpack.c.b16 %v1355, %v1354
    %v1442 = vpack.c.b16 %v1357, %v1356
    %v1443 = vpack.c.b16 %v1359, %v1358
    %v1444 = vpack.c.b16 %v1361, %v1360
    %v1445 = vpack.c.b16 %v1363, %v1362
    %v1446 = vpack.c.b16 %v1365, %v1364
    %v1447 = vpack.c.b16 %v1367, %v1366
    %v1448 = vpack.c.b16 %v1369, %v1368
    %v1449 = vpack.c.b16 %v1371, %v1370
    %v1450 = vpack.c.b16 %v1373, %v1372
    %v1451 = vpack.c.b16 %v1375, %v1374
    %v1452 = vpack.c.b16 %v1377, %v1376
    %v1453 = vpack.c.b16 %v1379, %v1378
    %v1454 = vpack.c.b16 %v1381, %v1380
    %v1455 = vpack.c.b16 %v1383, %v1382
    %v1456 = vpack.c.b16 %v1385, %v1384
    %v1457 = vpack.c.b16 %v1387, %v1386
    %v1458 = vpack.c.b16 %v1389, %v1388
    %v1459 = vpack.c.b16 %v1391, %v1390
    %v1460 = vpack.c.b16 %v1393, %v1392
    %v1461 = vpack.c.b16 %v1395, %v1394
    %v1462 = vpack.c.b16 %v1397, %v1396
    %v1463 = vpack.c.b16 %v1399, %v1398
    %v1464 = vpack.c.b16 %v1401, %v1400
    %v1465 = vpack.c.b16 %v1403, %v1402
    %v1466 = vpack.c.b16 %v1405, %v1404
    %v1467 = vpack.c.b16 %v1407, %v1406
    %v1468 = vpack.c.b16 %v1409, %v1408
    %v1469 = vpack.c.b16 %v1411, %v1410
    %v1470 = vpack.c.b16 %v1413, %v1412
    %v1471 = vpack.c.b16 %v1415, %v1414
    %v1472 = vpack.c.b16 %v1417, %v1416
    %v1473 = vpack.c.b16 %v1419, %v1418
    %v1474 = vpack.c.b16 %v1421, %v1420
    %v1475 = vpack.c.b16 %v1423, %v1422
    %v1476 = vpack.c.b16 %v1425, %v1424
    %v1477 = vpack.c.b16 %v1427, %v1426
    %v1478 = vpack.c.b16 %v1429, %v1428
    %v1479 = vpack.c.b16 %v1431, %v1430
    %1528 = vmatpush.bf16.msra.mxu0 %v1439
    %1529 = vmatpush.bf16.msra.mxu0 %v1438
    %1530 = vmatpush.bf16.msra.mxu0 %v1437
    %1531 = vmatpush.bf16.msra.mxu0 %v1436
    %1532 = vmatpush.bf16.msra.mxu0 %v1435
    %1533 = vmatpush.bf16.msra.mxu0 %v1434
    %1534 = vmatpush.bf16.msra.mxu0 %v1433
    %1535 = vmatpush.bf16.msra.mxu0 %v1432
    %1536 = vmatmul.bf16.gmra.mxu0 %v1122
    %v1537 = vpop.f32.mrf.mxu0
    %v1538 = vadd.f32 %v1238, %v1537
    %v1539 = vpop.f32.mrf.mxu0
    %1540 = vdwg.mxu0
    %1541 = vmatpush.bf16.msra.mxu0 %v1447
    %1542 = vmatpush.bf16.msra.mxu0 %v1446
    %1543 = vmatpush.bf16.msra.mxu0 %v1445
    %1544 = vmatpush.bf16.msra.mxu0 %v1444
    %1545 = vmatpush.bf16.msra.mxu0 %v1443
    %1546 = vmatpush.bf16.msra.mxu0 %v1442
    %1547 = vmatpush.bf16.msra.mxu0 %v1441
    %1548 = vmatpush.bf16.msra.mxu0 %v1440
    %1549 = vmatmul.bf16.gmra.mxu0 %v1123
    %v1550 = vpop.f32.mrf.mxu0
    %v1551 = vadd.f32 %v1538, %v1550
    %v1552 = vpop.f32.mrf.mxu0
    %1553 = vdwg.mxu0
    %1554 = vmatpush.bf16.msra.mxu0 %v1455
    %1555 = vmatpush.bf16.msra.mxu0 %v1454
    %1556 = vmatpush.bf16.msra.mxu0 %v1453
    %1557 = vmatpush.bf16.msra.mxu0 %v1452
    %1558 = vmatpush.bf16.msra.mxu0 %v1451
    %1559 = vmatpush.bf16.msra.mxu0 %v1450
    %1560 = vmatpush.bf16.msra.mxu0 %v1449
    %1561 = vmatpush.bf16.msra.mxu0 %v1448
    %1562 = vmatmul.bf16.gmra.mxu0 %v1132
    %v1563 = vpop.f32.mrf.mxu0
    %v1564 = vadd.f32 %v1551, %v1563
    %v1565 = vpop.f32.mrf.mxu0
    %1566 = vdwg.mxu0
    %1567 = vmatpush.bf16.msra.mxu0 %v1463
    %1568 = vmatpush.bf16.msra.mxu0 %v1462
    %1569 = vmatpush.bf16.msra.mxu0 %v1461
    %1570 = vmatpush.bf16.msra.mxu0 %v1460
    %1571 = vmatpush.bf16.msra.mxu0 %v1459
    %1572 = vmatpush.bf16.msra.mxu0 %v1458
    %1573 = vmatpush.bf16.msra.mxu0 %v1457
    %1574 = vmatpush.bf16.msra.mxu0 %v1456
    %1575 = vmatmul.bf16.gmra.mxu0 %v1133
    %v1576 = vpop.f32.mrf.mxu0
    %v1577 = vadd.f32 %v1564, %v1576
    %v1578 = vpop.f32.mrf.mxu0
    %1579 = vdwg.mxu0
    %1580 = vmatpush.bf16.msra.mxu0 %v1471
    %1581 = vmatpush.bf16.msra.mxu0 %v1470
    %1582 = vmatpush.bf16.msra.mxu0 %v1469
    %1583 = vmatpush.bf16.msra.mxu0 %v1468
    %1584 = vmatpush.bf16.msra.mxu0 %v1467
    %1585 = vmatpush.bf16.msra.mxu0 %v1466
    %1586 = vmatpush.bf16.msra.mxu0 %v1465
    %1587 = vmatpush.bf16.msra.mxu0 %v1464
    %1588 = vmatmul.bf16.gmra.mxu0 %v1134
    %v1589 = vpop.f32.mrf.mxu0
    %v1590 = vadd.f32 %v1577, %v1589
    %v1591 = vpop.f32.mrf.mxu0
    %1592 = vdwg.mxu0
    %1593 = vmatpush.bf16.msra.mxu0 %v1479
    %1594 = vmatpush.bf16.msra.mxu0 %v1478
    %1595 = vmatpush.bf16.msra.mxu0 %v1477
    %1596 = vmatpush.bf16.msra.mxu0 %v1476
    %1597 = vmatpush.bf16.msra.mxu0 %v1475
    %1598 = vmatpush.bf16.msra.mxu0 %v1474
    %1599 = vmatpush.bf16.msra.mxu0 %v1473
    %1600 = vmatpush.bf16.msra.mxu0 %v1472
    %1601 = vmatmul.bf16.gmra.mxu0 %v1135
    %v1602 = vpop.f32.mrf.mxu0
    %v1603 = vadd.f32 %v1590, %v1602
    %v1604 = vpop.f32.mrf.mxu0
    %1605 = vdwg.mxu0
    %v1606 = vlaneseq
    %v1607 = vand.u32 %v1606, 127
    %vm1608 = vcmp.lt.s32.totalorder %v1607, 8
    %v1609 = vsel %vm1608, 16.0, 1.0
    %v1610 = vxor.u32 %v1603, 2147483648
    %v1611 = vmul.f32 %v1610, 1.442695
    %v1612 = vpow.pop %v1611
    %v1613 = vadd.f32 %v1612, 1.0
    %v1614 = vrcp.pop %v1613
    %v1615 = vmul.f32 %v1613, %v1614
    %v1616 = vsub.f32 1.0, %v1615
    %v1617 = vmul.f32 %v1614, %v1616
    %v1618 = vadd.f32 %v1614, %v1617
    %vm1619 = vweird.f32 %v1613
    %vm1620 = vweird.f32 %v1614
    %vm1621 = vmor %vm1619, %vm1620
    %v1622 = vsel %vm1621, %v1614, %v1618
    %v1623 = vand.u32 2147483647, %v1613
    %vm1624 = vcmp.eq.f32.partialorder %v1623, 8.507059e+37
    %v1625 = vand.u32 %v1613, 2147483648
    %v1626 = vor.u32 1.1754944e-38, %v1625
    %v1627 = vsel %vm1624, %v1626, %v1622
    %v1628 = vmul.f32 1.0, %v1627
    %v1629 = vmul.f32 %v1628, %v1609
    %1630 = vst [vmem:[#allocation11] sm:$0xff] %v1629
    // Predicated region
    $region50: #{tpu_custom_call.1} parent=1 // pred_check
      _
    $region51: #{tpu_custom_call.1} parent=1 // pred_check_branch
      %1632 = sbr.rel (0) target = $region53
    $region52: #{tpu_custom_call.1} parent=1 // pred_region
      %1634 = vsyncadd [#allocation4], 0
      %s1636 = sshll.u32 [#allocation11], 4
      %s1637 = int_to_ptr.vmem [resolvable:$true] %s1636
      %s1638 = sshll.u32 %s7, 4
      %s1639 = int_to_ptr.hbm [resolvable:$true] %s1638
      %1641 = dma.vmem_to_hbm [thread:$0]  %s1637, 128, %s1639, [#allocation4]
    $region53: #{tpu_custom_call.1} parent=1 // pred_fallthru
      _
    // Predicated region
    $region54: #{tpu_custom_call.1} parent=1 // pred_check
      _
    $region55: #{tpu_custom_call.1} parent=1 // pred_check_branch
      %1643 = sbr.rel (0) target = $region57
    $region56: #{tpu_custom_call.1} parent=1 // pred_region
      %1645 = dma.done [#allocation4], 128
    $region57: #{tpu_custom_call.1} parent=1 // pred_fallthru
      _
    %1646 = vsyncpa [#allocation3], 1
    %1647 = vsyncpa [#allocation6], 1
    %1648 = vsyncpa [#allocation9], 1
    %1649 = vsyncpa [#allocation4], 1

</llo_original>
